<compile_context>
chip_gen: v5e
topology: v5e:2x2
jax: 0.10.0
libtpu: 0.0.40
codegen_flags: <defaults>
</compile_context>

<pallas_src>
import jax
import jax.numpy as jnp
from jax.experimental import pallas as pl
from jax.experimental.pallas import tpu as pltpu

IGNORE_LABEL = 255
CENTER_LOSS_WEIGHT = 100.0
OFFSET_LOSS_WEIGHT = 1.0

MAX_TILE_N = 16384   # voxels per semantic grid step (sized for v7x VMEM)
MAX_TILE_P = 32768   # pixels per regression grid step


def _choose_tile(n, max_tile):
    """Largest multiple of 128 that divides n (n is a multiple of 128)."""
    t = min(max_tile, n)
    t -= t % 128
    t = max(t, 128)
    while n % t != 0:
        t -= 128
    return t


# ----------------------------------------------------------------------------
# Kernel 1: per-voxel semantic work, lane-dense (C, TILE_N) layout.
#   outputs (all per-tile, no cross-grid accumulation -> fully parallel grid):
#     neg_errors (C, N): -|fg - softmax|            (0 on ignored voxels)
#     fg         (C, N): one-hot of label           (0 on ignored voxels)
#     ce         (1, N): -log_softmax[label]        (0 on ignored voxels)
# ----------------------------------------------------------------------------
def _semantic_kernel(logits_ref, labels_ref, neg_err_ref, fg_ref, ce_ref):
    lg = logits_ref[0].astype(jnp.float32)        # (C, TN)
    lab = labels_ref[0]                           # (1, TN) int32
    c, tn = lg.shape

    valid = (lab != IGNORE_LABEL).astype(jnp.float32)            # (1, TN)

    m = jnp.max(lg, axis=0, keepdims=True)                       # (1, TN)
    shifted = lg - m
    ex = jnp.exp(shifted)
    denom = jnp.sum(ex, axis=0, keepdims=True)                   # (1, TN)
    probs = ex / denom                                           # softmax over C

    cls = jax.lax.broadcasted_iota(jnp.int32, (c, tn), 0)
    onehot = (cls == lab).astype(jnp.float32)                    # 0 for label 255
    fg = onehot * valid
    errors = jnp.abs(fg - probs) * valid

    # CE with ignore_index: -(shifted[label] - log(denom)) on valid voxels.
    picked = jnp.sum(onehot * shifted, axis=0, keepdims=True)    # (1, TN)
    ce = (jnp.log(denom) - picked) * valid

    neg_err_ref[...] = -errors        # negated so the ascending sort = descending errors
    fg_ref[...] = fg
    ce_ref[...] = ce


def _semantic_stats(logits3, labels3, tile_n):
    # logits3: (B, C, HWZ), labels3: (B, 1, HWZ); HWZ % tile_n == 0.
    b, c, hwz = logits3.shape
    nt = hwz // tile_n
    n = b * hwz

    def out_map(bi, i):
        return (0, bi * nt + i)

    out_shape = (
        jax.ShapeDtypeStruct((c, n), jnp.float32),   # -errors
        jax.ShapeDtypeStruct((c, n), jnp.float32),   # fg
        jax.ShapeDtypeStruct((1, n), jnp.float32),   # ce
    )
    return pl.pallas_call(
        _semantic_kernel,
        out_shape=out_shape,
        grid=(b, nt),
        in_specs=[
            pl.BlockSpec((1, c, tile_n), lambda bi, i: (bi, 0, i)),
            pl.BlockSpec((1, 1, tile_n), lambda bi, i: (bi, 0, i)),
        ],
        out_specs=(
            pl.BlockSpec((c, tile_n), out_map),
            pl.BlockSpec((c, tile_n), out_map),
            pl.BlockSpec((1, tile_n), out_map),
        ),
        compiler_params=pltpu.CompilerParams(
            dimension_semantics=("parallel", "parallel")),
    )(logits3, labels3)


# ----------------------------------------------------------------------------
# Kernel 2: center / offset regression reductions (lane-dense, accumulated).
# ----------------------------------------------------------------------------
def _regression_kernel(c_ref, gc_ref, off_ref, goff_ref,
                       sq_ref, cpos_ref, abs_ref, ocnt_ref):
    @pl.when(pl.program_id(0) == 0)
    def _():
        sq_ref[...] = jnp.zeros_like(sq_ref)
        cpos_ref[...] = jnp.zeros_like(cpos_ref)
        abs_ref[...] = jnp.zeros_like(abs_ref)
        ocnt_ref[...] = jnp.zeros_like(ocnt_ref)

    c = c_ref[...].astype(jnp.float32)        # (1, TP)
    gc = gc_ref[...].astype(jnp.float32)      # (1, TP)
    off = off_ref[...].astype(jnp.float32)    # (1, 2*TP)
    goff = goff_ref[...].astype(jnp.float32)  # (1, 2*TP)

    d = c - gc
    sq_ref[...] = sq_ref[...] + jnp.sum(d * d)
    cpos_ref[...] = cpos_ref[...] + jnp.sum((gc > 0.0).astype(jnp.float32))
    abs_ref[...] = abs_ref[...] + jnp.sum(jnp.abs(off - goff))
    ocnt_ref[...] = ocnt_ref[...] + jnp.sum((goff != 0.0).astype(jnp.float32))


def _regression_stats(center_f, gt_center_f, offset_f, gt_offset_f, tile_p):
    _, pp = center_f.shape
    scalar = jax.ShapeDtypeStruct((1, 1), jnp.float32)
    return pl.pallas_call(
        _regression_kernel,
        out_shape=(scalar, scalar, scalar, scalar),
        grid=(pp // tile_p,),
        in_specs=[
            pl.BlockSpec((1, tile_p), lambda i: (0, i)),
            pl.BlockSpec((1, tile_p), lambda i: (0, i)),
            pl.BlockSpec((1, 2 * tile_p), lambda i: (0, i)),
            pl.BlockSpec((1, 2 * tile_p), lambda i: (0, i)),
        ],
        out_specs=(pl.BlockSpec((1, 1), lambda i: (0, 0)),) * 4,
        compiler_params=pltpu.CompilerParams(
            dimension_semantics=("arbitrary",)),
    )(center_f, gt_center_f, offset_f, gt_offset_f)


# ----------------------------------------------------------------------------
# Lovasz-Softmax tail: global per-class descending sort + Lovasz gradient.
# Single multi-operand sort along the contiguous last axis of the (C, N)
# kernel outputs.  Ignored / padded voxels carry error=0, fg=0 so they sort
# last and contribute exactly 0 (identical value to filtering them out).
# The global sort itself has no clean Pallas equivalent -> plain JAX.
# ----------------------------------------------------------------------------
def _lovasz_from_stats(neg_errors, fg):
    neg_sorted, fg_sorted = jax.lax.sort(
        (neg_errors, fg), dimension=1, num_keys=1, is_stable=False)
    gts = jnp.sum(fg, axis=1, keepdims=True)                     # (C, 1)
    inter = gts - jnp.cumsum(fg_sorted, axis=1)
    union = gts + jnp.cumsum(1.0 - fg_sorted, axis=1)
    jaccard = 1.0 - inter / union
    grad = jnp.concatenate(
        [jaccard[:, :1], jaccard[:, 1:] - jaccard[:, :-1]], axis=1)
    per_class = -jnp.sum(neg_sorted * grad, axis=1)              # = sum(err_sorted*grad)
    present = (gts[:, 0] > 0).astype(jnp.float32)
    n_present = jnp.sum(present)
    lov = jnp.where(n_present > 0,
                    jnp.sum(per_class * present) / jnp.maximum(n_present, 1.0),
                    0.0)
    valid_cnt = jnp.sum(gts)          # number of non-ignored voxels
    return lov, valid_cnt


# ----------------------------------------------------------------------------
# Full forward
# ----------------------------------------------------------------------------
@jax.jit
def panoptic_loss_forward(prediction, center, offset,
                          gt_label, gt_center, gt_offset):
    B, C, H, W, Z = prediction.shape
    HWZ = H * W * Z

    # --- semantic loss (lovasz + CE), channel-first layout kept as-is ---
    logits3 = prediction.reshape(B, C, HWZ)                     # free reshape
    labels3 = gt_label.reshape(B, 1, HWZ).astype(jnp.int32)     # free reshape

    pad_n = (-HWZ) % 128
    if pad_n:
        logits3 = jnp.pad(logits3, ((0, 0), (0, 0), (0, pad_n)))
        labels3 = jnp.pad(labels3, ((0, 0), (0, 0), (0, pad_n)),
                          constant_values=IGNORE_LABEL)
    tile_n = _choose_tile(HWZ + pad_n, MAX_TILE_N)

    neg_errors, fg, ce = _semantic_stats(logits3, labels3, tile_n)

    lovasz, valid_cnt = _lovasz_from_stats(neg_errors, fg)
    ce_sum = jnp.sum(ce)
    ce_loss = jnp.where(valid_cnt > 0,
                        ce_sum / jnp.maximum(valid_cnt, 1.0), 0.0)
    loss = lovasz + ce_loss

    # --- center (MSE) + offset (L1) losses ---
    P = B * H * W
    center_f = center.reshape(1, P)
    gt_center_f = gt_center.reshape(1, P)
    offset_f = offset.reshape(1, 2 * P)
    gt_offset_f = gt_offset.reshape(1, 2 * P)

    pad_p = (-P) % 128
    if pad_p:
        center_f = jnp.pad(center_f, ((0, 0), (0, pad_p)))
        gt_center_f = jnp.pad(gt_center_f, ((0, 0), (0, pad_p)))
        offset_f = jnp.pad(offset_f, ((0, 0), (0, 2 * pad_p)))
        gt_offset_f = jnp.pad(gt_offset_f, ((0, 0), (0, 2 * pad_p)))
    tile_p = _choose_tile(P + pad_p, MAX_TILE_P)

    sq_sum, cpos_cnt, abs_sum, ocnt = _regression_stats(
        center_f, gt_center_f, offset_f, gt_offset_f, tile_p)

    mse_mean = sq_sum[0, 0] / float(center.size)
    l1_mean = abs_sum[0, 0] / float(offset.size)

    # center_mask.sum() > 0  <=>  any(gt_center > 0) or any(gt_label valid)
    # (labels assumed in [0, C) or 255, as required by torch CrossEntropy).
    center_gate = (cpos_cnt[0, 0] + valid_cnt) > 0
    center_loss = jnp.where(center_gate, mse_mean * CENTER_LOSS_WEIGHT, 0.0)
    offset_loss = jnp.where(ocnt[0, 0] > 0, l1_mean * OFFSET_LOSS_WEIGHT, 0.0)

    return loss + center_loss + offset_loss


if __name__ == "__main__":
    key = jax.random.PRNGKey(0)
    B, C, H, W, Z = 2, 8, 16, 16, 8
    k1, k2, k3, k4, k5, k6, k7, k8 = jax.random.split(key, 8)

    prediction = jax.random.normal(k1, (B, C, H, W, Z), jnp.float32)
    gt_label = jax.random.randint(k2, (B, H, W, Z), 0, C).astype(jnp.int32)
    ignore = jax.random.bernoulli(k3, 0.1, (B, H, W, Z))
    gt_label = jnp.where(ignore, IGNORE_LABEL, gt_label).astype(jnp.int32)

    center = jax.nn.sigmoid(jax.random.normal(k4, (B, 1, H, W), jnp.float32))
    gt_center = jnp.clip(jax.random.normal(k5, (B, 1, H, W), jnp.float32), 0.0, 1.0)

    offset = jax.random.normal(k6, (B, 2, H, W), jnp.float32)
    gt_offset = jnp.where(jax.random.bernoulli(k7, 0.5, (B, 2, H, W)),
                          jax.random.normal(k8, (B, 2, H, W), jnp.float32),
                          0.0)

    loss = panoptic_loss_forward(prediction, center, offset,
                                 gt_label, gt_center, gt_offset)
    jax.block_until_ready(loss)
    assert loss.shape == () and jnp.isfinite(loss)
    print("KERNEL_OK")
</pallas_src>

<mosaic_0001>
module attributes {stable_mosaic.version = 11 : i64} {
  func.func @_semantic_kernel(%arg0: i32, %arg1: i32, %arg2: memref<1x8x2048xf32, #tpu.memory_space<vmem>>, %arg3: memref<1x1x2048xi32, #tpu.memory_space<vmem>>, %arg4: memref<8x2048xf32, #tpu.memory_space<vmem>>, %arg5: memref<8x2048xf32, #tpu.memory_space<vmem>>, %arg6: memref<1x2048xf32, #tpu.memory_space<vmem>>) attributes {dimension_semantics = [#tpu.dimension_semantics<parallel>, #tpu.dimension_semantics<parallel>], iteration_bounds = array<i64: 2, 1>, scalar_prefetch = 0 : i64, scratch_operands = 0 : i64, tpu.core_type = #tpu.core_type<tc>, window_params = [{transform_indices = @transform_0, window_bounds = array<i64: 1, 8, 2048>}, {transform_indices = @transform_1, window_bounds = array<i64: 1, 1, 2048>}, {transform_indices = @transform_2, window_bounds = array<i64: 8, 2048>}, {transform_indices = @transform_3, window_bounds = array<i64: 8, 2048>}, {transform_indices = @transform_4, window_bounds = array<i64: 1, 2048>}]} {
    %c0 = arith.constant 0 : index
    %c0_0 = arith.constant 0 : index
    %c0_1 = arith.constant 0 : index
    %0 = vector.load %arg2[%c0, %c0_0, %c0_1] : memref<1x8x2048xf32, #tpu.memory_space<vmem>>, vector<1x8x2048xf32>
    %1 = vector.shape_cast %0 : vector<1x8x2048xf32> to vector<8x2048xf32>
    %c0_2 = arith.constant 0 : index
    %c0_3 = arith.constant 0 : index
    %c0_4 = arith.constant 0 : index
    %2 = vector.load %arg3[%c0_2, %c0_3, %c0_4] : memref<1x1x2048xi32, #tpu.memory_space<vmem>>, vector<1x1x2048xi32>
    %3 = vector.shape_cast %2 : vector<1x1x2048xi32> to vector<1x2048xi32>
    %c255_i32 = arith.constant 255 : i32
    %4 = vector.broadcast %c255_i32 : i32 to vector<1x2048xi32>
    %5 = arith.cmpi ne, %3, %4 : vector<1x2048xi32>
    %6 = arith.extui %5 : vector<1x2048xi1> to vector<1x2048xi32>
    %7 = arith.sitofp %6 : vector<1x2048xi32> to vector<1x2048xf32>
    %cst = arith.constant dense<0xFF800000> : vector<2048xf32>
    %8 = vector.multi_reduction <maximumf>, %1, %cst [0] : vector<8x2048xf32> to vector<2048xf32>
    %9 = vector.shape_cast %8 : vector<2048xf32> to vector<1x2048xf32>
    %10 = vector.broadcast %9 : vector<1x2048xf32> to vector<8x2048xf32>
    %11 = arith.subf %1, %10 : vector<8x2048xf32>
    %12 = math.exp %11 : vector<8x2048xf32>
    %cst_5 = arith.constant dense<0.000000e+00> : vector<2048xf32>
    %13 = vector.multi_reduction <add>, %12, %cst_5 [0] : vector<8x2048xf32> to vector<2048xf32>
    %14 = vector.shape_cast %13 : vector<2048xf32> to vector<1x2048xf32>
    %15 = vector.broadcast %14 : vector<1x2048xf32> to vector<8x2048xf32>
    %16 = arith.divf %12, %15 : vector<8x2048xf32>
    %17 = tpu.iota {dimensions = array<i32: 0>} : vector<8x2048xi32>
    %18 = vector.broadcast %3 : vector<1x2048xi32> to vector<8x2048xi32>
    %19 = arith.cmpi eq, %17, %18 : vector<8x2048xi32>
    %20 = arith.extui %19 : vector<8x2048xi1> to vector<8x2048xi32>
    %21 = arith.sitofp %20 : vector<8x2048xi32> to vector<8x2048xf32>
    %22 = vector.broadcast %7 : vector<1x2048xf32> to vector<8x2048xf32>
    %23 = arith.mulf %21, %22 : vector<8x2048xf32>
    %24 = arith.subf %23, %16 : vector<8x2048xf32>
    %25 = math.absf %24 : vector<8x2048xf32>
    %26 = vector.broadcast %7 : vector<1x2048xf32> to vector<8x2048xf32>
    %27 = arith.mulf %25, %26 : vector<8x2048xf32>
    %28 = arith.mulf %21, %11 : vector<8x2048xf32>
    %cst_6 = arith.constant dense<0.000000e+00> : vector<2048xf32>
    %29 = vector.multi_reduction <add>, %28, %cst_6 [0] : vector<8x2048xf32> to vector<2048xf32>
    %30 = vector.shape_cast %29 : vector<2048xf32> to vector<1x2048xf32>
    %31 = math.log %14 : vector<1x2048xf32>
    %32 = arith.subf %31, %30 : vector<1x2048xf32>
    %33 = arith.mulf %32, %7 : vector<1x2048xf32>
    %cst_7 = arith.constant 0.000000e+00 : f32
    %34 = vector.broadcast %cst_7 : f32 to vector<8x2048xf32>
    %35 = arith.subf %34, %27 : vector<8x2048xf32>
    %c0_8 = arith.constant 0 : index
    %c0_9 = arith.constant 0 : index
    %36 = vector.load %arg4[%c0_8, %c0_9] : memref<8x2048xf32, #tpu.memory_space<vmem>>, vector<8x2048xf32>
    tpu.vector_store %arg4[%c0_8, %c0_9], %35 {strides = array<i32>} : memref<8x2048xf32, #tpu.memory_space<vmem>>, vector<8x2048xf32>,
    %c0_10 = arith.constant 0 : index
    %c0_11 = arith.constant 0 : index
    %37 = vector.load %arg5[%c0_10, %c0_11] : memref<8x2048xf32, #tpu.memory_space<vmem>>, vector<8x2048xf32>
    tpu.vector_store %arg5[%c0_10, %c0_11], %23 {strides = array<i32>} : memref<8x2048xf32, #tpu.memory_space<vmem>>, vector<8x2048xf32>,
    %c0_12 = arith.constant 0 : index
    %c0_13 = arith.constant 0 : index
    %38 = vector.load %arg6[%c0_12, %c0_13] : memref<1x2048xf32, #tpu.memory_space<vmem>>, vector<1x2048xf32>
    tpu.vector_store %arg6[%c0_12, %c0_13], %33 {strides = array<i32>} : memref<1x2048xf32, #tpu.memory_space<vmem>>, vector<1x2048xf32>,
    return
  }
  func.func @transform_0(%arg0: i32, %arg1: i32) -> (i32, i32, i32) {
    %c0_i32 = arith.constant 0 : i32
    %c0_i32_0 = arith.constant 0 : i32
    return %arg0, %c0_i32, %arg1 : i32, i32, i32
  }
  func.func @transform_1(%arg0: i32, %arg1: i32) -> (i32, i32, i32) {
    %c0_i32 = arith.constant 0 : i32
    %c0_i32_0 = arith.constant 0 : i32
    return %arg0, %c0_i32, %arg1 : i32, i32, i32
  }
  func.func @transform_2(%arg0: i32, %arg1: i32) -> (i32, i32) {
    %c1_i32 = arith.constant 1 : i32
    %0 = arith.muli %arg0, %c1_i32 : i32
    %1 = arith.addi %0, %arg1 : i32
    %c0_i32 = arith.constant 0 : i32
    %c0_i32_0 = arith.constant 0 : i32
    return %c0_i32, %1 : i32, i32
  }
  func.func @transform_3(%arg0: i32, %arg1: i32) -> (i32, i32) {
    %c1_i32 = arith.constant 1 : i32
    %0 = arith.muli %arg0, %c1_i32 : i32
    %1 = arith.addi %0, %arg1 : i32
    %c0_i32 = arith.constant 0 : i32
    %c0_i32_0 = arith.constant 0 : i32
    return %c0_i32, %1 : i32, i32
  }
  func.func @transform_4(%arg0: i32, %arg1: i32) -> (i32, i32) {
    %c1_i32 = arith.constant 1 : i32
    %0 = arith.muli %arg0, %c1_i32 : i32
    %1 = arith.addi %0, %arg1 : i32
    %c0_i32 = arith.constant 0 : i32
    %c0_i32_0 = arith.constant 0 : i32
    return %c0_i32, %1 : i32, i32
  }
}

module attributes {stable_mosaic.version = 11 : i64} {
  func.func @_regression_kernel(%arg0: i32, %arg1: memref<1x512xf32, #tpu.memory_space<vmem>>, %arg2: memref<1x512xf32, #tpu.memory_space<vmem>>, %arg3: memref<1x1024xf32, #tpu.memory_space<vmem>>, %arg4: memref<1x1024xf32, #tpu.memory_space<vmem>>, %arg5: memref<1x1xf32, #tpu.memory_space<vmem>>, %arg6: memref<1x1xf32, #tpu.memory_space<vmem>>, %arg7: memref<1x1xf32, #tpu.memory_space<vmem>>, %arg8: memref<1x1xf32, #tpu.memory_space<vmem>>) attributes {dimension_semantics = [#tpu.dimension_semantics<arbitrary>], iteration_bounds = array<i64: 1>, scalar_prefetch = 0 : i64, scratch_operands = 0 : i64, tpu.core_type = #tpu.core_type<tc>, window_params = [{transform_indices = @transform_0, window_bounds = array<i64: 1, 512>}, {transform_indices = @transform_1, window_bounds = array<i64: 1, 512>}, {transform_indices = @transform_2, window_bounds = array<i64: 1, 1024>}, {transform_indices = @transform_3, window_bounds = array<i64: 1, 1024>}, {pipeline_mode = #tpu.pipeline_mode<synchronous>, transform_indices = @transform_4, window_bounds = array<i64: 1, 1>}, {pipeline_mode = #tpu.pipeline_mode<synchronous>, transform_indices = @transform_5, window_bounds = array<i64: 1, 1>}, {pipeline_mode = #tpu.pipeline_mode<synchronous>, transform_indices = @transform_6, window_bounds = array<i64: 1, 1>}, {pipeline_mode = #tpu.pipeline_mode<synchronous>, transform_indices = @transform_7, window_bounds = array<i64: 1, 1>}]} {
    %c0_i32 = arith.constant 0 : i32
    %0 = arith.cmpi eq, %arg0, %c0_i32 : i32
    %1 = arith.extui %0 : i1 to i32
    %c0_i32_0 = arith.constant 0 : i32
    %2 = arith.cmpi ne, %1, %c0_i32_0 : i32
    scf.if %2 {
      %cst_29 = arith.constant 0.000000e+00 : f32
      %51 = vector.broadcast %cst_29 : f32 to vector<1x1xf32>
      %c0_30 = arith.constant 0 : index
      %c0_31 = arith.constant 0 : index
      %52 = vector.load %arg5[%c0_30, %c0_31] : memref<1x1xf32, #tpu.memory_space<vmem>>, vector<1x1xf32>
      tpu.vector_store %arg5[%c0_30, %c0_31], %51 {strides = array<i32>} : memref<1x1xf32, #tpu.memory_space<vmem>>, vector<1x1xf32>,
      %cst_32 = arith.constant 0.000000e+00 : f32
      %53 = vector.broadcast %cst_32 : f32 to vector<1x1xf32>
      %c0_33 = arith.constant 0 : index
      %c0_34 = arith.constant 0 : index
      %54 = vector.load %arg6[%c0_33, %c0_34] : memref<1x1xf32, #tpu.memory_space<vmem>>, vector<1x1xf32>
      tpu.vector_store %arg6[%c0_33, %c0_34], %53 {strides = array<i32>} : memref<1x1xf32, #tpu.memory_space<vmem>>, vector<1x1xf32>,
      %cst_35 = arith.constant 0.000000e+00 : f32
      %55 = vector.broadcast %cst_35 : f32 to vector<1x1xf32>
      %c0_36 = arith.constant 0 : index
      %c0_37 = arith.constant 0 : index
      %56 = vector.load %arg7[%c0_36, %c0_37] : memref<1x1xf32, #tpu.memory_space<vmem>>, vector<1x1xf32>
      tpu.vector_store %arg7[%c0_36, %c0_37], %55 {strides = array<i32>} : memref<1x1xf32, #tpu.memory_space<vmem>>, vector<1x1xf32>,
      %cst_38 = arith.constant 0.000000e+00 : f32
      %57 = vector.broadcast %cst_38 : f32 to vector<1x1xf32>
      %c0_39 = arith.constant 0 : index
      %c0_40 = arith.constant 0 : index
      %58 = vector.load %arg8[%c0_39, %c0_40] : memref<1x1xf32, #tpu.memory_space<vmem>>, vector<1x1xf32>
      tpu.vector_store %arg8[%c0_39, %c0_40], %57 {strides = array<i32>} : memref<1x1xf32, #tpu.memory_space<vmem>>, vector<1x1xf32>,
    } else {
    }
    %c0 = arith.constant 0 : index
    %c0_1 = arith.constant 0 : index
    %3 = vector.load %arg1[%c0, %c0_1] : memref<1x512xf32, #tpu.memory_space<vmem>>, vector<1x512xf32>
    %c0_2 = arith.constant 0 : index
    %c0_3 = arith.constant 0 : index
    %4 = vector.load %arg2[%c0_2, %c0_3] : memref<1x512xf32, #tpu.memory_space<vmem>>, vector<1x512xf32>
    %c0_4 = arith.constant 0 : index
    %c0_5 = arith.constant 0 : index
    %5 = vector.load %arg3[%c0_4, %c0_5] : memref<1x1024xf32, #tpu.memory_space<vmem>>, vector<1x1024xf32>
    %c0_6 = arith.constant 0 : index
    %c0_7 = arith.constant 0 : index
    %6 = vector.load %arg4[%c0_6, %c0_7] : memref<1x1024xf32, #tpu.memory_space<vmem>>, vector<1x1024xf32>
    %7 = arith.subf %3, %4 : vector<1x512xf32>
    %c0_8 = arith.constant 0 : index
    %c0_9 = arith.constant 0 : index
    %8 = vector.load %arg5[%c0_8, %c0_9] : memref<1x1xf32, #tpu.memory_space<vmem>>, vector<1x1xf32>
    %9 = arith.mulf %7, %7 : vector<1x512xf32>
    %10 = vector.shape_cast %9 : vector<1x512xf32> to vector<1x1x512xf32>
    %cst = arith.constant dense<0.000000e+00> : vector<1xf32>
    %11 = vector.multi_reduction <add>, %10, %cst [1, 2] : vector<1x1x512xf32> to vector<1xf32>
    %12 = vector.shape_cast %11 : vector<1xf32> to vector<1x1x1xf32>
    %13 = vector.extract %12[0, 0, 0] : f32 from vector<1x1x1xf32>
    %14 = vector.broadcast %13 : f32 to vector<1x1xf32>
    %15 = arith.addf %8, %14 : vector<1x1xf32>
    %c0_10 = arith.constant 0 : index
    %c0_11 = arith.constant 0 : index
    %16 = vector.load %arg5[%c0_10, %c0_11] : memref<1x1xf32, #tpu.memory_space<vmem>>, vector<1x1xf32>
    tpu.vector_store %arg5[%c0_10, %c0_11], %15 {strides = array<i32>} : memref<1x1xf32, #tpu.memory_space<vmem>>, vector<1x1xf32>,
    %c0_12 = arith.constant 0 : index
    %c0_13 = arith.constant 0 : index
    %17 = vector.load %arg6[%c0_12, %c0_13] : memref<1x1xf32, #tpu.memory_space<vmem>>, vector<1x1xf32>
    %cst_14 = arith.constant 0.000000e+00 : f32
    %18 = vector.broadcast %cst_14 : f32 to vector<1x512xf32>
    %19 = arith.cmpf ogt, %4, %18 : vector<1x512xf32>
    %20 = arith.extui %19 : vector<1x512xi1> to vector<1x512xi32>
    %21 = arith.sitofp %20 : vector<1x512xi32> to vector<1x512xf32>
    %22 = vector.shape_cast %21 : vector<1x512xf32> to vector<1x1x512xf32>
    %cst_15 = arith.constant dense<0.000000e+00> : vector<1xf32>
    %23 = vector.multi_reduction <add>, %22, %cst_15 [1, 2] : vector<1x1x512xf32> to vector<1xf32>
    %24 = vector.shape_cast %23 : vector<1xf32> to vector<1x1x1xf32>
    %25 = vector.extract %24[0, 0, 0] : f32 from vector<1x1x1xf32>
    %26 = vector.broadcast %25 : f32 to vector<1x1xf32>
    %27 = arith.addf %17, %26 : vector<1x1xf32>
    %c0_16 = arith.constant 0 : index
    %c0_17 = arith.constant 0 : index
    %28 = vector.load %arg6[%c0_16, %c0_17] : memref<1x1xf32, #tpu.memory_space<vmem>>, vector<1x1xf32>
    tpu.vector_store %arg6[%c0_16, %c0_17], %27 {strides = array<i32>} : memref<1x1xf32, #tpu.memory_space<vmem>>, vector<1x1xf32>,
    %c0_18 = arith.constant 0 : index
    %c0_19 = arith.constant 0 : index
    %29 = vector.load %arg7[%c0_18, %c0_19] : memref<1x1xf32, #tpu.memory_space<vmem>>, vector<1x1xf32>
    %30 = arith.subf %5, %6 : vector<1x1024xf32>
    %31 = math.absf %30 : vector<1x1024xf32>
    %32 = vector.shape_cast %31 : vector<1x1024xf32> to vector<1x1x1024xf32>
    %cst_20 = arith.constant dense<0.000000e+00> : vector<1xf32>
    %33 = vector.multi_reduction <add>, %32, %cst_20 [1, 2] : vector<1x1x1024xf32> to vector<1xf32>
    %34 = vector.shape_cast %33 : vector<1xf32> to vector<1x1x1xf32>
    %35 = vector.extract %34[0, 0, 0] : f32 from vector<1x1x1xf32>
    %36 = vector.broadcast %35 : f32 to vector<1x1xf32>
    %37 = arith.addf %29, %36 : vector<1x1xf32>
    %c0_21 = arith.constant 0 : index
    %c0_22 = arith.constant 0 : index
    %38 = vector.load %arg7[%c0_21, %c0_22] : memref<1x1xf32, #tpu.memory_space<vmem>>, vector<1x1xf32>
    tpu.vector_store %arg7[%c0_21, %c0_22], %37 {strides = array<i32>} : memref<1x1xf32, #tpu.memory_space<vmem>>, vector<1x1xf32>,
    %c0_23 = arith.constant 0 : index
    %c0_24 = arith.constant 0 : index
    %39 = vector.load %arg8[%c0_23, %c0_24] : memref<1x1xf32, #tpu.memory_space<vmem>>, vector<1x1xf32>
    %cst_25 = arith.constant 0.000000e+00 : f32
    %40 = vector.broadcast %cst_25 : f32 to vector<1x1024xf32>
    %41 = arith.cmpf one, %6, %40 : vector<1x1024xf32>
    %42 = arith.extui %41 : vector<1x1024xi1> to vector<1x1024xi32>
    %43 = arith.sitofp %42 : vector<1x1024xi32> to vector<1x1024xf32>
    %44 = vector.shape_cast %43 : vector<1x1024xf32> to vector<1x1x1024xf32>
    %cst_26 = arith.constant dense<0.000000e+00> : vector<1xf32>
    %45 = vector.multi_reduction <add>, %44, %cst_26 [1, 2] : vector<1x1x1024xf32> to vector<1xf32>
    %46 = vector.shape_cast %45 : vector<1xf32> to vector<1x1x1xf32>
    %47 = vector.extract %46[0, 0, 0] : f32 from vector<1x1x1xf32>
    %48 = vector.broadcast %47 : f32 to vector<1x1xf32>
    %49 = arith.addf %39, %48 : vector<1x1xf32>
    %c0_27 = arith.constant 0 : index
    %c0_28 = arith.constant 0 : index
    %50 = vector.load %arg8[%c0_27, %c0_28] : memref<1x1xf32, #tpu.memory_space<vmem>>, vector<1x1xf32>
    tpu.vector_store %arg8[%c0_27, %c0_28], %49 {strides = array<i32>} : memref<1x1xf32, #tpu.memory_space<vmem>>, vector<1x1xf32>,
    return
  }
  func.func @transform_0(%arg0: i32) -> (i32, i32) {
    %c0_i32 = arith.constant 0 : i32
    %c0_i32_0 = arith.constant 0 : i32
    return %c0_i32, %arg0 : i32, i32
  }
  func.func @transform_1(%arg0: i32) -> (i32, i32) {
    %c0_i32 = arith.constant 0 : i32
    %c0_i32_0 = arith.constant 0 : i32
    return %c0_i32, %arg0 : i32, i32
  }
  func.func @transform_2(%arg0: i32) -> (i32, i32) {
    %c0_i32 = arith.constant 0 : i32
    %c0_i32_0 = arith.constant 0 : i32
    return %c0_i32, %arg0 : i32, i32
  }
  func.func @transform_3(%arg0: i32) -> (i32, i32) {
    %c0_i32 = arith.constant 0 : i32
    %c0_i32_0 = arith.constant 0 : i32
    return %c0_i32, %arg0 : i32, i32
  }
  func.func @transform_4(%arg0: i32) -> (i32, i32) {
    %c0_i32 = arith.constant 0 : i32
    %c0_i32_0 = arith.constant 0 : i32
    %c0_i32_1 = arith.constant 0 : i32
    return %c0_i32, %c0_i32_0 : i32, i32
  }
  func.func @transform_5(%arg0: i32) -> (i32, i32) {
    %c0_i32 = arith.constant 0 : i32
    %c0_i32_0 = arith.constant 0 : i32
    %c0_i32_1 = arith.constant 0 : i32
    return %c0_i32, %c0_i32_0 : i32, i32
  }
  func.func @transform_6(%arg0: i32) -> (i32, i32) {
    %c0_i32 = arith.constant 0 : i32
    %c0_i32_0 = arith.constant 0 : i32
    %c0_i32_1 = arith.constant 0 : i32
    return %c0_i32, %c0_i32_0 : i32, i32
  }
  func.func @transform_7(%arg0: i32) -> (i32, i32) {
    %c0_i32 = arith.constant 0 : i32
    %c0_i32_0 = arith.constant 0 : i32
    %c0_i32_1 = arith.constant 0 : i32
    return %c0_i32, %c0_i32_0 : i32, i32
  }
}

</mosaic_0001>

<llo_original>
// kernel: panoptic_loss_forward.2
$region0: #{panoptic_loss_forward.2}
  #allocation0 [shape = 'u32[]', space=smem, size = 0x4, offset = 0x4, fixed_abs, tag = 'smem constant byte address 0x4 - core index']
  #allocation1 [shape = 'u32[72,128]{1,0:T(1,128)}', space=vmem, size = 0x9000, scoped, tag = 'internal scratch']
  %s0 = inlined_call_operand.vmem [shape: f32[2,8,2048], index: 0, kind: input, shape index: {}]
  %s1 = inlined_call_operand.vmem [shape: s32[2,1,2048], index: 1, kind: input, shape index: {}]
  %s2 = inlined_call_operand.vmem [shape: f32[8,4096], index: 2, kind: output, shape index: {0}]
  %s3 = inlined_call_operand.vmem [shape: f32[8,4096], index: 3, kind: output, shape index: {1}]
  %s4 = inlined_call_operand.vmem [shape: f32[1,4096], index: 4, kind: output, shape index: {2}]
  %5 = xla_tuple %s2, %s3, %s4
  %s6 = sld [smem:[#allocation0]]
  $region57: #{panoptic_loss_forward.2} parent=0
    _
  %s8 = ssub.s32 1, %s6
  %s9 = scalar_select 0, %s8, %s6
  loop: start=0, step=1, limit=4
  $region2: #{panoptic_loss_forward.2} parent=0 // loop_pre_header
    _
  $region3: #{panoptic_loss_forward.2} parent=0 // loop_header
    %s11 = sphi 0, %s15
    %p12 = scmp.ge.s32.totalorder %s11, 4
    %s18 = sphi 0, %s30
    %s19 = sphi 0, %s26
    %s20 = sphi 0, %s18
    %s21 = sphi 0, %s19
    %s22 = sphi 0, %s20
    %s23 = sphi 0, %s21
    %s35 = sphi 0, %s37
    %s38 = sphi 0, %s35
    %s39 = sphi 0, %s38
    %s55 = sphi 0, %s39
    %s63 = sphi 0, %s65
    %s66 = sphi 0, %s63
    %s67 = sphi 0, %s66
    %s83 = sphi 0, %s67
    %s91 = sphi 0, %s93
    %s94 = sphi 0, %s91
    %s95 = sphi 0, %s94
    %s111 = sphi 0, %s95
    %s119 = sphi 0, %s121
    %s122 = sphi 0, %s119
    %s123 = sphi 0, %s122
    %s139 = sphi 0, %s123
    %s147 = sphi 0, %s149
    %s150 = sphi 0, %s147
    %s151 = sphi 0, %s150
    %s167 = sphi 0, %s151
  $region4: #{panoptic_loss_forward.2} parent=0 // loop_header_branch
    %14 = sbr.rel (%p12) target = $region8
  $region5: #{panoptic_loss_forward.2} parent=0 // loop_body
    %s16 = ssub.s32 %s11, 1
    %s17 = ssub.s32 %s11, 2
    %s24 = sadd.s32 1, %s19
    %p25 = scmp.ge.s32.totalorder %s24, 1
    %s26 = scalar_select %p25, 0, %s24
    %s27 = sadd.s32 1, %s18
    %s28 = scalar_select %p25, %s27, %s18
    %p29 = scmp.ge.s32.totalorder %s28, 2
    %s30 = scalar_select %p29, 0, %s28
    %s31 = ssub.s32 %s18, %s30
    %s32 = ssub.s32 %s19, %s26
    %s33 = sor.u32 %s31, %s32
    %p34 = scmp.eq.s32.totalorder %s33, 0
    %s36 = sadd.s32 %s35, 1
    %s37 = scalar_select %p34, %s35, %s36
    %p40 = pneg %p34
    %p41 = scmp.eq.s32.totalorder %s11, 1
    %p42 = por %p40, %p41
    %p43 = scmp.ne.s32.totalorder %s35, %s38
    %p44 = scmp.eq.s32.totalorder %s11, 0
    %p45 = por %p43, %p44
    %p46 = scmp.ne.s32.totalorder %s35, %s38
    %p47 = scmp.eq.s32.totalorder %s16, 1
    %p48 = por %p46, %p47
    %p49 = scmp.ne.s32.totalorder %s38, %s39
    %p50 = scmp.eq.s32.totalorder %s16, 0
    %p51 = por %p49, %p50
    %p52 = scmp.ne.s32.totalorder %s38, %s39
    %p53 = scmp.eq.s32.totalorder %s17, 1
    %p54 = por %p52, %p53
    %p56 = scmp.ne.s32.totalorder %s39, %s55
    %p57 = scmp.eq.s32.totalorder %s17, 0
    %p58 = por %p56, %p57
    %s59 = ssub.s32 %s18, %s30
    %s60 = ssub.s32 %s19, %s26
    %s61 = sor.u32 %s59, %s60
    %p62 = scmp.eq.s32.totalorder %s61, 0
    %s64 = sadd.s32 %s63, 1
    %s65 = scalar_select %p62, %s63, %s64
    %p68 = pneg %p62
    %p69 = scmp.eq.s32.totalorder %s11, 1
    %p70 = por %p68, %p69
    %p71 = scmp.ne.s32.totalorder %s63, %s66
    %p72 = scmp.eq.s32.totalorder %s11, 0
    %p73 = por %p71, %p72
    %p74 = scmp.ne.s32.totalorder %s63, %s66
    %p75 = scmp.eq.s32.totalorder %s16, 1
    %p76 = por %p74, %p75
    %p77 = scmp.ne.s32.totalorder %s66, %s67
    %p78 = scmp.eq.s32.totalorder %s16, 0
    %p79 = por %p77, %p78
    %p80 = scmp.ne.s32.totalorder %s66, %s67
    %p81 = scmp.eq.s32.totalorder %s17, 1
    %p82 = por %p80, %p81
    %p84 = scmp.ne.s32.totalorder %s67, %s83
    %p85 = scmp.eq.s32.totalorder %s17, 0
    %p86 = por %p84, %p85
    %s87 = sadd.s32 %s18, %s19
    %s88 = sadd.s32 %s30, %s26
    %s89 = ssub.s32 %s87, %s88
    %p90 = scmp.eq.s32.totalorder %s89, 0
    %s92 = sadd.s32 %s91, 1
    %s93 = scalar_select %p90, %s91, %s92
    %p96 = pneg %p90
    %p97 = scmp.eq.s32.totalorder %s11, 1
    %p98 = por %p96, %p97
    %p99 = scmp.ne.s32.totalorder %s91, %s94
    %p100 = scmp.eq.s32.totalorder %s11, 0
    %p101 = por %p99, %p100
    %p102 = scmp.ne.s32.totalorder %s91, %s94
    %p103 = scmp.eq.s32.totalorder %s16, 1
    %p104 = por %p102, %p103
    %p105 = scmp.ne.s32.totalorder %s94, %s95
    %p106 = scmp.eq.s32.totalorder %s16, 0
    %p107 = por %p105, %p106
    %p108 = scmp.ne.s32.totalorder %s94, %s95
    %p109 = scmp.eq.s32.totalorder %s17, 1
    %p110 = por %p108, %p109
    %p112 = scmp.ne.s32.totalorder %s95, %s111
    %p113 = scmp.eq.s32.totalorder %s17, 0
    %p114 = por %p112, %p113
    %s115 = sadd.s32 %s18, %s19
    %s116 = sadd.s32 %s30, %s26
    %s117 = ssub.s32 %s115, %s116
    %p118 = scmp.eq.s32.totalorder %s117, 0
    %s120 = sadd.s32 %s119, 1
    %s121 = scalar_select %p118, %s119, %s120
    %p124 = pneg %p118
    %p125 = scmp.eq.s32.totalorder %s11, 1
    %p126 = por %p124, %p125
    %p127 = scmp.ne.s32.totalorder %s119, %s122
    %p128 = scmp.eq.s32.totalorder %s11, 0
    %p129 = por %p127, %p128
    %p130 = scmp.ne.s32.totalorder %s119, %s122
    %p131 = scmp.eq.s32.totalorder %s16, 1
    %p132 = por %p130, %p131
    %p133 = scmp.ne.s32.totalorder %s122, %s123
    %p134 = scmp.eq.s32.totalorder %s16, 0
    %p135 = por %p133, %p134
    %p136 = scmp.ne.s32.totalorder %s122, %s123
    %p137 = scmp.eq.s32.totalorder %s17, 1
    %p138 = por %p136, %p137
    %p140 = scmp.ne.s32.totalorder %s123, %s139
    %p141 = scmp.eq.s32.totalorder %s17, 0
    %p142 = por %p140, %p141
    %s143 = sadd.s32 %s18, %s19
    %s144 = sadd.s32 %s30, %s26
    %s145 = ssub.s32 %s143, %s144
    %p146 = scmp.eq.s32.totalorder %s145, 0
    %s148 = sadd.s32 %s147, 1
    %s149 = scalar_select %p146, %s147, %s148
    %p152 = pneg %p146
    %p153 = scmp.eq.s32.totalorder %s11, 1
    %p154 = por %p152, %p153
    %p155 = scmp.ne.s32.totalorder %s147, %s150
    %p156 = scmp.eq.s32.totalorder %s11, 0
    %p157 = por %p155, %p156
    %p158 = scmp.ne.s32.totalorder %s147, %s150
    %p159 = scmp.eq.s32.totalorder %s16, 1
    %p160 = por %p158, %p159
    %p161 = scmp.ne.s32.totalorder %s150, %s151
    %p162 = scmp.eq.s32.totalorder %s16, 0
    %p163 = por %p161, %p162
    %p164 = scmp.ne.s32.totalorder %s150, %s151
    %p165 = scmp.eq.s32.totalorder %s17, 1
    %p166 = por %p164, %p165
    %p168 = scmp.ne.s32.totalorder %s151, %s167
    %p169 = scmp.eq.s32.totalorder %s17, 0
    %p170 = por %p168, %p169
    %p171 = scmp.le.s32.totalorder 1, %s11
    %p172 = scmp.lt.s32.totalorder %s11, 3
    %p173 = pnand %p171, %p172
    %p174 = pneg %p173
    // Predicated region
    $region9: #{panoptic_loss_forward.2} parent=5 // pred_check
      _
    $region10: #{panoptic_loss_forward.2} parent=5 // pred_check_branch
      %176 = sbr.rel (%p173) target = $region12
    $region11: #{panoptic_loss_forward.2} parent=5 // pred_region
      %s177 = ssub.s32 %s11, 1
    $region12: #{panoptic_loss_forward.2} parent=5 // pred_fallthru
      _
    %p178 = scmp.lt.s32.totalorder %s11, 2
    // Predicated region
    $region13: #{panoptic_loss_forward.2} parent=5 // pred_check
      %p179 = pneg %p178
    $region14: #{panoptic_loss_forward.2} parent=5 // pred_check_branch
      %181 = sbr.rel (%p179) target = $region16
    $region15: #{panoptic_loss_forward.2} parent=5 // pred_region
      // Predicated region
      $region17: #{panoptic_loss_forward.2} parent=15 // pred_check
        %p182 = pneg %p45
      $region18: #{panoptic_loss_forward.2} parent=15 // pred_check_branch
        %184 = sbr.rel (%p182) target = $region20
      $region19: #{panoptic_loss_forward.2} parent=15 // pred_region
        %s185 = smul.u32 16, %s19
        %p186 = scmp.lt.s32.totalorder %s18, 1
        %s187 = scalar_select %p186, %s18, 1
        %p188 = scmp.lt.s32.totalorder %s185, 15
        %s189 = scalar_select %p188, %s185, 15
        %s190 = smul.addr %s187, 16
        %s191 = sadd.s32 %s189, %s190
        %s192 = smul.addr %s191, 8
        %s193 = scalar_lea.vmem %s0, %s192
        %s194 = smul.u32 16, %s19
      $region20: #{panoptic_loss_forward.2} parent=15 // pred_fallthru
        _
      // Predicated region
      $region21: #{panoptic_loss_forward.2} parent=15 // pred_check
        %p195 = pneg %p73
      $region22: #{panoptic_loss_forward.2} parent=15 // pred_check_branch
        %197 = sbr.rel (%p195) target = $region24
      $region23: #{panoptic_loss_forward.2} parent=15 // pred_region
        %s198 = smul.u32 16, %s19
        %p199 = scmp.lt.s32.totalorder %s18, 1
        %s200 = scalar_select %p199, %s18, 1
        %p201 = scmp.lt.s32.totalorder %s198, 15
        %s202 = scalar_select %p201, %s198, 15
        %s203 = smul.addr %s200, 16
        %s204 = sadd.s32 %s202, %s203
        %s205 = scalar_lea.vmem %s1, %s204
        %s206 = smul.u32 16, %s19
      $region24: #{panoptic_loss_forward.2} parent=15 // pred_fallthru
        _
    $region16: #{panoptic_loss_forward.2} parent=5 // pred_fallthru
      _
    %p207 = scmp.le.s32.totalorder 1, %s11
    %p208 = scmp.lt.s32.totalorder %s11, 3
    %p209 = pnand %p207, %p208
    %p210 = pneg %p209
    // Predicated region
    $region25: #{panoptic_loss_forward.2} parent=5 // pred_check
      _
    $region26: #{panoptic_loss_forward.2} parent=5 // pred_check_branch
      %212 = sbr.rel (%p209) target = $region28
    $region27: #{panoptic_loss_forward.2} parent=5 // pred_region
      %s213 = ssub.s32 %s11, 1
      %s214 = smul.u32 16, %s21
      %p215 = scmp.lt.s32.totalorder %s20, 1
      %s216 = scalar_select %p215, %s20, 1
      %p217 = scmp.lt.s32.totalorder %s214, 15
      %s218 = scalar_select %p217, %s214, 15
      %s219 = smul.addr %s216, 16
      %s220 = sadd.s32 %s218, %s219
      %s221 = smul.addr %s220, 8
      %s222 = scalar_lea.vmem %s0, %s221
      %p223 = pneg %p51
      %p224 = pneg %p48
      %s225 = smul.u32 16, %s21
      %p226 = scmp.lt.s32.totalorder %s20, 1
      %s227 = scalar_select %p226, %s20, 1
      %p228 = scmp.lt.s32.totalorder %s225, 15
      %s229 = scalar_select %p228, %s225, 15
      %s230 = smul.addr %s227, 16
      %s231 = sadd.s32 %s229, %s230
      %s232 = scalar_lea.vmem %s1, %s231
      %p233 = pneg %p79
      %p234 = pneg %p76
      %p235 = pneg %p107
      %p236 = pneg %p104
      %s237 = sadd.s32 %s20, %s21
      %s238 = smul.u32 16, %s237
      %p239 = scmp.lt.s32.totalorder %s238, 31
      %s240 = scalar_select %p239, %s238, 31
      %s241 = smul.addr %s240, 8
      %s242 = scalar_lea.vmem %s2, %s241
      %p243 = pneg %p135
      %p244 = pneg %p132
      %s245 = sadd.s32 %s20, %s21
      %s246 = smul.u32 16, %s245
      %p247 = scmp.lt.s32.totalorder %s246, 31
      %s248 = scalar_select %p247, %s246, 31
      %s249 = smul.addr %s248, 8
      %s250 = scalar_lea.vmem %s3, %s249
      %p251 = pneg %p163
      %p252 = pneg %p160
      %s253 = sadd.s32 %s20, %s21
      %s254 = smul.u32 16, %s253
      %p255 = scmp.lt.s32.totalorder %s254, 31
      %s256 = scalar_select %p255, %s254, 31
      %s257 = scalar_lea.vmem %s4, %s256
      %s258 = smul.u32 16, %s21
      %p259 = scmp.lt.s32.totalorder %s20, 1
      %s260 = scalar_select %p259, %s20, 1
      %p261 = scmp.lt.s32.totalorder %s258, 15
      %s262 = scalar_select %p261, %s258, 15
      %s263 = smul.addr %s260, 16
      %s264 = sadd.s32 %s262, %s263
      %s265 = smul.addr %s264, 8
      %s266 = scalar_lea.vmem %s0, %s265
      %s267 = smul.u32 16, %s21
      %s268 = smul.u32 16, %s21
      %p269 = scmp.lt.s32.totalorder %s20, 1
      %s270 = scalar_select %p269, %s20, 1
      %p271 = scmp.lt.s32.totalorder %s268, 15
      %s272 = scalar_select %p271, %s268, 15
      %s273 = smul.addr %s270, 16
      %s274 = sadd.s32 %s272, %s273
      %s275 = scalar_lea.vmem %s1, %s274
      %s276 = smul.u32 16, %s21
      %s277 = sadd.s32 %s20, %s21
      %s278 = smul.u32 16, %s277
      %p279 = scmp.lt.s32.totalorder %s278, 31
      %s280 = scalar_select %p279, %s278, 31
      %s281 = smul.addr %s280, 8
      %s282 = scalar_lea.vmem %s2, %s281
      %s283 = sadd.s32 %s20, %s21
      %s284 = smul.u32 16, %s283
      %s285 = sadd.s32 %s20, %s21
      %s286 = smul.u32 16, %s285
      %p287 = scmp.lt.s32.totalorder %s286, 31
      %s288 = scalar_select %p287, %s286, 31
      %s289 = smul.addr %s288, 8
      %s290 = scalar_lea.vmem %s3, %s289
      %s291 = sadd.s32 %s20, %s21
      %s292 = smul.u32 16, %s291
      %s293 = sadd.s32 %s20, %s21
      %s294 = smul.u32 16, %s293
      %p295 = scmp.lt.s32.totalorder %s294, 31
      %s296 = scalar_select %p295, %s294, 31
      %s297 = scalar_lea.vmem %s4, %s296
      %s298 = sadd.s32 %s20, %s21
      %s299 = smul.u32 16, %s298
      %v300 = vld [vmem:[%s266] sm:$0xff]
      %v301 = vld [vmem:[%s266 + $0x8] sm:$0xff]
      %v302 = vld [vmem:[%s266 + $0x10] sm:$0xff]
      %v303 = vld [vmem:[%s266 + $0x18] sm:$0xff]
      %v304 = vld [vmem:[%s266 + $0x20] sm:$0xff]
      %v305 = vld [vmem:[%s266 + $0x28] sm:$0xff]
      %v306 = vld [vmem:[%s266 + $0x30] sm:$0xff]
      %v307 = vld [vmem:[%s266 + $0x38] sm:$0xff]
      %v308 = vld [vmem:[%s266 + $0x40] sm:$0xff]
      %v309 = vld [vmem:[%s266 + $0x48] sm:$0xff]
      %v310 = vld [vmem:[%s266 + $0x50] sm:$0xff]
      %v311 = vld [vmem:[%s266 + $0x58] sm:$0xff]
      %v312 = vld [vmem:[%s266 + $0x60] sm:$0xff]
      %v313 = vld [vmem:[%s266 + $0x68] sm:$0xff]
      %v314 = vld [vmem:[%s266 + $0x70] sm:$0xff]
      %v315 = vld [vmem:[%s266 + $0x78] sm:$0xff]
      %v316 = vld [vmem:[%s275] sm:$0xff]
      %v317 = vld [vmem:[%s275 + $0x8] sm:$0xff]
      %vm318 = vcmp.ne.s32.totalorder %v316, 255
      %vm319 = vcmp.ne.s32.totalorder %v317, 255
      %v320 = vsel %vm318, 1, 0
      %v321 = vsel %vm319, 1, 0
      %v322 = vcvt.s32.f32 %v320
      %v323 = vcvt.s32.f32 %v321
      %v324 = vrot.slane %v300, 4
      %v325 = vmax.f32 %v300, %v324
      %v326 = vrot.slane %v325, 2
      %v327 = vmax.f32 %v325, %v326
      %v328 = vrot.slane %v327, 1
      %v329 = vmax.f32 %v327, %v328
      %v330 = vrot.slane %v301, 4
      %v331 = vmax.f32 %v301, %v330
      %v332 = vrot.slane %v331, 2
      %v333 = vmax.f32 %v331, %v332
      %v334 = vrot.slane %v333, 1
      %v335 = vmax.f32 %v333, %v334
      %v336 = vrot.slane %v302, 4
      %v337 = vmax.f32 %v302, %v336
      %v338 = vrot.slane %v337, 2
      %v339 = vmax.f32 %v337, %v338
      %v340 = vrot.slane %v339, 1
      %v341 = vmax.f32 %v339, %v340
      %v342 = vrot.slane %v303, 4
      %v343 = vmax.f32 %v303, %v342
      %v344 = vrot.slane %v343, 2
      %v345 = vmax.f32 %v343, %v344
      %v346 = vrot.slane %v345, 1
      %v347 = vmax.f32 %v345, %v346
      %v348 = vrot.slane %v304, 4
      %v349 = vmax.f32 %v304, %v348
      %v350 = vrot.slane %v349, 2
      %v351 = vmax.f32 %v349, %v350
      %v352 = vrot.slane %v351, 1
      %v353 = vmax.f32 %v351, %v352
      %v354 = vrot.slane %v305, 4
      %v355 = vmax.f32 %v305, %v354
      %v356 = vrot.slane %v355, 2
      %v357 = vmax.f32 %v355, %v356
      %v358 = vrot.slane %v357, 1
      %v359 = vmax.f32 %v357, %v358
      %v360 = vrot.slane %v306, 4
      %v361 = vmax.f32 %v306, %v360
      %v362 = vrot.slane %v361, 2
      %v363 = vmax.f32 %v361, %v362
      %v364 = vrot.slane %v363, 1
      %v365 = vmax.f32 %v363, %v364
      %v366 = vrot.slane %v307, 4
      %v367 = vmax.f32 %v307, %v366
      %v368 = vrot.slane %v367, 2
      %v369 = vmax.f32 %v367, %v368
      %v370 = vrot.slane %v369, 1
      %v371 = vmax.f32 %v369, %v370
      %v372 = vrot.slane %v308, 4
      %v373 = vmax.f32 %v308, %v372
      %v374 = vrot.slane %v373, 2
      %v375 = vmax.f32 %v373, %v374
      %v376 = vrot.slane %v375, 1
      %v377 = vmax.f32 %v375, %v376
      %v378 = vrot.slane %v309, 4
      %v379 = vmax.f32 %v309, %v378
      %v380 = vrot.slane %v379, 2
      %v381 = vmax.f32 %v379, %v380
      %v382 = vrot.slane %v381, 1
      %v383 = vmax.f32 %v381, %v382
      %v384 = vrot.slane %v310, 4
      %v385 = vmax.f32 %v310, %v384
      %v386 = vrot.slane %v385, 2
      %v387 = vmax.f32 %v385, %v386
      %v388 = vrot.slane %v387, 1
      %v389 = vmax.f32 %v387, %v388
      %v390 = vrot.slane %v311, 4
      %v391 = vmax.f32 %v311, %v390
      %v392 = vrot.slane %v391, 2
      %v393 = vmax.f32 %v391, %v392
      %v394 = vrot.slane %v393, 1
      %v395 = vmax.f32 %v393, %v394
      %v396 = vrot.slane %v312, 4
      %v397 = vmax.f32 %v312, %v396
      %v398 = vrot.slane %v397, 2
      %v399 = vmax.f32 %v397, %v398
      %v400 = vrot.slane %v399, 1
      %v401 = vmax.f32 %v399, %v400
      %v402 = vrot.slane %v313, 4
      %v403 = vmax.f32 %v313, %v402
      %v404 = vrot.slane %v403, 2
      %v405 = vmax.f32 %v403, %v404
      %v406 = vrot.slane %v405, 1
      %v407 = vmax.f32 %v405, %v406
      %v408 = vrot.slane %v314, 4
      %v409 = vmax.f32 %v314, %v408
      %v410 = vrot.slane %v409, 2
      %v411 = vmax.f32 %v409, %v410
      %v412 = vrot.slane %v411, 1
      %v413 = vmax.f32 %v411, %v412
      %v414 = vrot.slane %v315, 4
      %v415 = vmax.f32 %v315, %v414
      %v416 = vrot.slane %v415, 2
      %v417 = vmax.f32 %v415, %v416
      %v418 = vrot.slane %v417, 1
      %v419 = vmax.f32 %v417, %v418
      %v420 = vsub.f32 %v300, %v329
      %v421 = vsub.f32 %v301, %v335
      %v422 = vsub.f32 %v302, %v341
      %v423 = vsub.f32 %v303, %v347
      %v424 = vsub.f32 %v304, %v353
      %v425 = vsub.f32 %v305, %v359
      %v426 = vsub.f32 %v306, %v365
      %v427 = vsub.f32 %v307, %v371
      %v428 = vsub.f32 %v308, %v377
      %v429 = vsub.f32 %v309, %v383
      %v430 = vsub.f32 %v310, %v389
      %v431 = vsub.f32 %v311, %v395
      %v432 = vsub.f32 %v312, %v401
      %v433 = vsub.f32 %v313, %v407
      %v434 = vsub.f32 %v314, %v413
      %v435 = vsub.f32 %v315, %v419
      %v436 = vmul.f32 %v420, 1.442695
      %v437 = vpow.pop %v436
      %v438 = vmul.f32 %v421, 1.442695
      %v439 = vpow.pop %v438
      %v440 = vmul.f32 %v422, 1.442695
      %v441 = vpow.pop %v440
      %v442 = vmul.f32 %v423, 1.442695
      %v443 = vpow.pop %v442
      %v444 = vmul.f32 %v424, 1.442695
      %v445 = vpow.pop %v444
      %v446 = vmul.f32 %v425, 1.442695
      %v447 = vpow.pop %v446
      %v448 = vmul.f32 %v426, 1.442695
      %v449 = vpow.pop %v448
      %v450 = vmul.f32 %v427, 1.442695
      %v451 = vpow.pop %v450
      %v452 = vmul.f32 %v428, 1.442695
      %v453 = vpow.pop %v452
      %v454 = vmul.f32 %v429, 1.442695
      %v455 = vpow.pop %v454
      %v456 = vmul.f32 %v430, 1.442695
      %v457 = vpow.pop %v456
      %v458 = vmul.f32 %v431, 1.442695
      %v459 = vpow.pop %v458
      %v460 = vmul.f32 %v432, 1.442695
      %v461 = vpow.pop %v460
      %v462 = vmul.f32 %v433, 1.442695
      %v463 = vpow.pop %v462
      %v464 = vmul.f32 %v434, 1.442695
      %v465 = vpow.pop %v464
      %v466 = vmul.f32 %v435, 1.442695
      %v467 = vpow.pop %v466
      %v468 = vrot.slane %v437, 4
      %v469 = vadd.f32 %v437, %v468
      %v470 = vrot.slane %v469, 2
      %v471 = vadd.f32 %v469, %v470
      %v472 = vrot.slane %v471, 1
      %v473 = vadd.f32 %v471, %v472
      %v474 = vrot.slane %v439, 4
      %v475 = vadd.f32 %v439, %v474
      %v476 = vrot.slane %v475, 2
      %v477 = vadd.f32 %v475, %v476
      %v478 = vrot.slane %v477, 1
      %v479 = vadd.f32 %v477, %v478
      %v480 = vrot.slane %v441, 4
      %v481 = vadd.f32 %v441, %v480
      %v482 = vrot.slane %v481, 2
      %v483 = vadd.f32 %v481, %v482
      %v484 = vrot.slane %v483, 1
      %v485 = vadd.f32 %v483, %v484
      %v486 = vrot.slane %v443, 4
      %v487 = vadd.f32 %v443, %v486
      %v488 = vrot.slane %v487, 2
      %v489 = vadd.f32 %v487, %v488
      %v490 = vrot.slane %v489, 1
      %v491 = vadd.f32 %v489, %v490
      %v492 = vrot.slane %v445, 4
      %v493 = vadd.f32 %v445, %v492
      %v494 = vrot.slane %v493, 2
      %v495 = vadd.f32 %v493, %v494
      %v496 = vrot.slane %v495, 1
      %v497 = vadd.f32 %v495, %v496
      %v498 = vrot.slane %v447, 4
      %v499 = vadd.f32 %v447, %v498
      %v500 = vrot.slane %v499, 2
      %v501 = vadd.f32 %v499, %v500
      %v502 = vrot.slane %v501, 1
      %v503 = vadd.f32 %v501, %v502
      %v504 = vrot.slane %v449, 4
      %v505 = vadd.f32 %v449, %v504
      %v506 = vrot.slane %v505, 2
      %v507 = vadd.f32 %v505, %v506
      %v508 = vrot.slane %v507, 1
      %v509 = vadd.f32 %v507, %v508
      %v510 = vrot.slane %v451, 4
      %v511 = vadd.f32 %v451, %v510
      %v512 = vrot.slane %v511, 2
      %v513 = vadd.f32 %v511, %v512
      %v514 = vrot.slane %v513, 1
      %v515 = vadd.f32 %v513, %v514
      %v516 = vrot.slane %v453, 4
      %v517 = vadd.f32 %v453, %v516
      %v518 = vrot.slane %v517, 2
      %v519 = vadd.f32 %v517, %v518
      %v520 = vrot.slane %v519, 1
      %v521 = vadd.f32 %v519, %v520
      %v522 = vrot.slane %v455, 4
      %v523 = vadd.f32 %v455, %v522
      %v524 = vrot.slane %v523, 2
      %v525 = vadd.f32 %v523, %v524
      %v526 = vrot.slane %v525, 1
      %v527 = vadd.f32 %v525, %v526
      %v528 = vrot.slane %v457, 4
      %v529 = vadd.f32 %v457, %v528
      %v530 = vrot.slane %v529, 2
      %v531 = vadd.f32 %v529, %v530
      %v532 = vrot.slane %v531, 1
      %v533 = vadd.f32 %v531, %v532
      %v534 = vrot.slane %v459, 4
      %v535 = vadd.f32 %v459, %v534
      %v536 = vrot.slane %v535, 2
      %v537 = vadd.f32 %v535, %v536
      %v538 = vrot.slane %v537, 1
      %v539 = vadd.f32 %v537, %v538
      %v540 = vrot.slane %v461, 4
      %v541 = vadd.f32 %v461, %v540
      %v542 = vrot.slane %v541, 2
      %v543 = vadd.f32 %v541, %v542
      %v544 = vrot.slane %v543, 1
      %v545 = vadd.f32 %v543, %v544
      %v546 = vrot.slane %v463, 4
      %v547 = vadd.f32 %v463, %v546
      %v548 = vrot.slane %v547, 2
      %v549 = vadd.f32 %v547, %v548
      %v550 = vrot.slane %v549, 1
      %v551 = vadd.f32 %v549, %v550
      %v552 = vrot.slane %v465, 4
      %v553 = vadd.f32 %v465, %v552
      %v554 = vrot.slane %v553, 2
      %v555 = vadd.f32 %v553, %v554
      %v556 = vrot.slane %v555, 1
      %v557 = vadd.f32 %v555, %v556
      %v558 = vrot.slane %v467, 4
      %v559 = vadd.f32 %v467, %v558
      %v560 = vrot.slane %v559, 2
      %v561 = vadd.f32 %v559, %v560
      %v562 = vrot.slane %v561, 1
      %v563 = vadd.f32 %v561, %v562
      %v564 = vrcp.pop %v473
      %v565 = vmul.f32 %v473, %v564
      %v566 = vsub.f32 1.0, %v565
      %v567 = vmul.f32 %v564, %v566
      %v568 = vadd.f32 %v564, %v567
      %vm569 = vweird.f32 %v473
      %vm570 = vweird.f32 %v564
      %vm571 = vmor %vm569, %vm570
      %v572 = vsel %vm571, %v564, %v568
      %v573 = vand.u32 2147483647, %v473
      %vm574 = vcmp.eq.f32.partialorder %v573, 8.507059e+37
      %v575 = vand.u32 %v473, 2147483648
      %v576 = vor.u32 1.1754944e-38, %v575
      %v577 = vsel %vm574, %v576, %v572
      %v578 = vmul.f32 %v437, %v577
      %v579 = vrcp.pop %v479
      %v580 = vmul.f32 %v479, %v579
      %v581 = vsub.f32 1.0, %v580
      %v582 = vmul.f32 %v579, %v581
      %v583 = vadd.f32 %v579, %v582
      %vm584 = vweird.f32 %v479
      %vm585 = vweird.f32 %v579
      %vm586 = vmor %vm584, %vm585
      %v587 = vsel %vm586, %v579, %v583
      %v588 = vand.u32 2147483647, %v479
      %vm589 = vcmp.eq.f32.partialorder %v588, 8.507059e+37
      %v590 = vand.u32 %v479, 2147483648
      %v591 = vor.u32 1.1754944e-38, %v590
      %v592 = vsel %vm589, %v591, %v587
      %v593 = vmul.f32 %v439, %v592
      %v594 = vrcp.pop %v485
      %v595 = vmul.f32 %v485, %v594
      %v596 = vsub.f32 1.0, %v595
      %v597 = vmul.f32 %v594, %v596
      %v598 = vadd.f32 %v594, %v597
      %vm599 = vweird.f32 %v485
      %vm600 = vweird.f32 %v594
      %vm601 = vmor %vm599, %vm600
      %v602 = vsel %vm601, %v594, %v598
      %v603 = vand.u32 2147483647, %v485
      %vm604 = vcmp.eq.f32.partialorder %v603, 8.507059e+37
      %v605 = vand.u32 %v485, 2147483648
      %v606 = vor.u32 1.1754944e-38, %v605
      %v607 = vsel %vm604, %v606, %v602
      %v608 = vmul.f32 %v441, %v607
      %v609 = vrcp.pop %v491
      %v610 = vmul.f32 %v491, %v609
      %v611 = vsub.f32 1.0, %v610
      %v612 = vmul.f32 %v609, %v611
      %v613 = vadd.f32 %v609, %v612
      %vm614 = vweird.f32 %v491
      %vm615 = vweird.f32 %v609
      %vm616 = vmor %vm614, %vm615
      %v617 = vsel %vm616, %v609, %v613
      %v618 = vand.u32 2147483647, %v491
      %vm619 = vcmp.eq.f32.partialorder %v618, 8.507059e+37
      %v620 = vand.u32 %v491, 2147483648
      %v621 = vor.u32 1.1754944e-38, %v620
      %v622 = vsel %vm619, %v621, %v617
      %v623 = vmul.f32 %v443, %v622
      %v624 = vrcp.pop %v497
      %v625 = vmul.f32 %v497, %v624
      %v626 = vsub.f32 1.0, %v625
      %v627 = vmul.f32 %v624, %v626
      %v628 = vadd.f32 %v624, %v627
      %vm629 = vweird.f32 %v497
      %vm630 = vweird.f32 %v624
      %vm631 = vmor %vm629, %vm630
      %v632 = vsel %vm631, %v624, %v628
      %v633 = vand.u32 2147483647, %v497
      %vm634 = vcmp.eq.f32.partialorder %v633, 8.507059e+37
      %v635 = vand.u32 %v497, 2147483648
      %v636 = vor.u32 1.1754944e-38, %v635
      %v637 = vsel %vm634, %v636, %v632
      %v638 = vmul.f32 %v445, %v637
      %v639 = vrcp.pop %v503
      %v640 = vmul.f32 %v503, %v639
      %v641 = vsub.f32 1.0, %v640
      %v642 = vmul.f32 %v639, %v641
      %v643 = vadd.f32 %v639, %v642
      %vm644 = vweird.f32 %v503
      %vm645 = vweird.f32 %v639
      %vm646 = vmor %vm644, %vm645
      %v647 = vsel %vm646, %v639, %v643
      %v648 = vand.u32 2147483647, %v503
      %vm649 = vcmp.eq.f32.partialorder %v648, 8.507059e+37
      %v650 = vand.u32 %v503, 2147483648
      %v651 = vor.u32 1.1754944e-38, %v650
      %v652 = vsel %vm649, %v651, %v647
      %v653 = vmul.f32 %v447, %v652
      %v654 = vrcp.pop %v509
      %v655 = vmul.f32 %v509, %v654
      %v656 = vsub.f32 1.0, %v655
      %v657 = vmul.f32 %v654, %v656
      %v658 = vadd.f32 %v654, %v657
      %vm659 = vweird.f32 %v509
      %vm660 = vweird.f32 %v654
      %vm661 = vmor %vm659, %vm660
      %v662 = vsel %vm661, %v654, %v658
      %v663 = vand.u32 2147483647, %v509
      %vm664 = vcmp.eq.f32.partialorder %v663, 8.507059e+37
      %v665 = vand.u32 %v509, 2147483648
      %v666 = vor.u32 1.1754944e-38, %v665
      %v667 = vsel %vm664, %v666, %v662
      %v668 = vmul.f32 %v449, %v667
      %v669 = vrcp.pop %v515
      %v670 = vmul.f32 %v515, %v669
      %v671 = vsub.f32 1.0, %v670
      %v672 = vmul.f32 %v669, %v671
      %v673 = vadd.f32 %v669, %v672
      %vm674 = vweird.f32 %v515
      %vm675 = vweird.f32 %v669
      %vm676 = vmor %vm674, %vm675
      %v677 = vsel %vm676, %v669, %v673
      %v678 = vand.u32 2147483647, %v515
      %vm679 = vcmp.eq.f32.partialorder %v678, 8.507059e+37
      %v680 = vand.u32 %v515, 2147483648
      %v681 = vor.u32 1.1754944e-38, %v680
      %v682 = vsel %vm679, %v681, %v677
      %v683 = vmul.f32 %v451, %v682
      %v684 = vrcp.pop %v521
      %v685 = vmul.f32 %v521, %v684
      %v686 = vsub.f32 1.0, %v685
      %v687 = vmul.f32 %v684, %v686
      %v688 = vadd.f32 %v684, %v687
      %vm689 = vweird.f32 %v521
      %vm690 = vweird.f32 %v684
      %vm691 = vmor %vm689, %vm690
      %v692 = vsel %vm691, %v684, %v688
      %v693 = vand.u32 2147483647, %v521
      %vm694 = vcmp.eq.f32.partialorder %v693, 8.507059e+37
      %v695 = vand.u32 %v521, 2147483648
      %v696 = vor.u32 1.1754944e-38, %v695
      %v697 = vsel %vm694, %v696, %v692
      %v698 = vmul.f32 %v453, %v697
      %v699 = vrcp.pop %v527
      %v700 = vmul.f32 %v527, %v699
      %v701 = vsub.f32 1.0, %v700
      %v702 = vmul.f32 %v699, %v701
      %v703 = vadd.f32 %v699, %v702
      %vm704 = vweird.f32 %v527
      %vm705 = vweird.f32 %v699
      %vm706 = vmor %vm704, %vm705
      %v707 = vsel %vm706, %v699, %v703
      %v708 = vand.u32 2147483647, %v527
      %vm709 = vcmp.eq.f32.partialorder %v708, 8.507059e+37
      %v710 = vand.u32 %v527, 2147483648
      %v711 = vor.u32 1.1754944e-38, %v710
      %v712 = vsel %vm709, %v711, %v707
      %v713 = vmul.f32 %v455, %v712
      %v714 = vrcp.pop %v533
      %v715 = vmul.f32 %v533, %v714
      %v716 = vsub.f32 1.0, %v715
      %v717 = vmul.f32 %v714, %v716
      %v718 = vadd.f32 %v714, %v717
      %vm719 = vweird.f32 %v533
      %vm720 = vweird.f32 %v714
      %vm721 = vmor %vm719, %vm720
      %v722 = vsel %vm721, %v714, %v718
      %v723 = vand.u32 2147483647, %v533
      %vm724 = vcmp.eq.f32.partialorder %v723, 8.507059e+37
      %v725 = vand.u32 %v533, 2147483648
      %v726 = vor.u32 1.1754944e-38, %v725
      %v727 = vsel %vm724, %v726, %v722
      %v728 = vmul.f32 %v457, %v727
      %v729 = vrcp.pop %v539
      %v730 = vmul.f32 %v539, %v729
      %v731 = vsub.f32 1.0, %v730
      %v732 = vmul.f32 %v729, %v731
      %v733 = vadd.f32 %v729, %v732
      %vm734 = vweird.f32 %v539
      %vm735 = vweird.f32 %v729
      %vm736 = vmor %vm734, %vm735
      %v737 = vsel %vm736, %v729, %v733
      %v738 = vand.u32 2147483647, %v539
      %vm739 = vcmp.eq.f32.partialorder %v738, 8.507059e+37
      %v740 = vand.u32 %v539, 2147483648
      %v741 = vor.u32 1.1754944e-38, %v740
      %v742 = vsel %vm739, %v741, %v737
      %v743 = vmul.f32 %v459, %v742
      %v744 = vrcp.pop %v545
      %v745 = vmul.f32 %v545, %v744
      %v746 = vsub.f32 1.0, %v745
      %v747 = vmul.f32 %v744, %v746
      %v748 = vadd.f32 %v744, %v747
      %vm749 = vweird.f32 %v545
      %vm750 = vweird.f32 %v744
      %vm751 = vmor %vm749, %vm750
      %v752 = vsel %vm751, %v744, %v748
      %v753 = vand.u32 2147483647, %v545
      %vm754 = vcmp.eq.f32.partialorder %v753, 8.507059e+37
      %v755 = vand.u32 %v545, 2147483648
      %v756 = vor.u32 1.1754944e-38, %v755
      %v757 = vsel %vm754, %v756, %v752
      %v758 = vmul.f32 %v461, %v757
      %v759 = vrcp.pop %v551
      %v760 = vmul.f32 %v551, %v759
      %v761 = vsub.f32 1.0, %v760
      %v762 = vmul.f32 %v759, %v761
      %v763 = vadd.f32 %v759, %v762
      %vm764 = vweird.f32 %v551
      %vm765 = vweird.f32 %v759
      %vm766 = vmor %vm764, %vm765
      %v767 = vsel %vm766, %v759, %v763
      %v768 = vand.u32 2147483647, %v551
      %vm769 = vcmp.eq.f32.partialorder %v768, 8.507059e+37
      %v770 = vand.u32 %v551, 2147483648
      %v771 = vor.u32 1.1754944e-38, %v770
      %v772 = vsel %vm769, %v771, %v767
      %v773 = vmul.f32 %v463, %v772
      %v774 = vrcp.pop %v557
      %v775 = vmul.f32 %v557, %v774
      %v776 = vsub.f32 1.0, %v775
      %v777 = vmul.f32 %v774, %v776
      %v778 = vadd.f32 %v774, %v777
      %vm779 = vweird.f32 %v557
      %vm780 = vweird.f32 %v774
      %vm781 = vmor %vm779, %vm780
      %v782 = vsel %vm781, %v774, %v778
      %v783 = vand.u32 2147483647, %v557
      %vm784 = vcmp.eq.f32.partialorder %v783, 8.507059e+37
      %v785 = vand.u32 %v557, 2147483648
      %v786 = vor.u32 1.1754944e-38, %v785
      %v787 = vsel %vm784, %v786, %v782
      %v788 = vmul.f32 %v465, %v787
      %v789 = vrcp.pop %v563
      %v790 = vmul.f32 %v563, %v789
      %v791 = vsub.f32 1.0, %v790
      %v792 = vmul.f32 %v789, %v791
      %v793 = vadd.f32 %v789, %v792
      %vm794 = vweird.f32 %v563
      %vm795 = vweird.f32 %v789
      %vm796 = vmor %vm794, %vm795
      %v797 = vsel %vm796, %v789, %v793
      %v798 = vand.u32 2147483647, %v563
      %vm799 = vcmp.eq.f32.partialorder %v798, 8.507059e+37
      %v800 = vand.u32 %v563, 2147483648
      %v801 = vor.u32 1.1754944e-38, %v800
      %v802 = vsel %vm799, %v801, %v797
      %v803 = vmul.f32 %v467, %v802
      %v804 = vlaneseq
      %v805 = vshrl.u32 %v804, 7
      %v806 = vperm.slane %v316, 0
      %v807 = vperm.slane %v316, 1
      %v808 = vperm.slane %v316, 2
      %v809 = vperm.slane %v316, 3
      %v810 = vperm.slane %v316, 4
      %v811 = vperm.slane %v316, 5
      %v812 = vperm.slane %v316, 6
      %v813 = vperm.slane %v316, 7
      %v814 = vperm.slane %v317, 0
      %v815 = vperm.slane %v317, 1
      %v816 = vperm.slane %v317, 2
      %v817 = vperm.slane %v317, 3
      %v818 = vperm.slane %v317, 4
      %v819 = vperm.slane %v317, 5
      %v820 = vperm.slane %v317, 6
      %v821 = vperm.slane %v317, 7
      %vm822 = vcmp.eq.s32.totalorder %v805, %v806
      %vm823 = vcmp.eq.s32.totalorder %v805, %v807
      %vm824 = vcmp.eq.s32.totalorder %v805, %v808
      %vm825 = vcmp.eq.s32.totalorder %v805, %v809
      %vm826 = vcmp.eq.s32.totalorder %v805, %v810
      %vm827 = vcmp.eq.s32.totalorder %v805, %v811
      %vm828 = vcmp.eq.s32.totalorder %v805, %v812
      %vm829 = vcmp.eq.s32.totalorder %v805, %v813
      %vm830 = vcmp.eq.s32.totalorder %v805, %v814
      %vm831 = vcmp.eq.s32.totalorder %v805, %v815
      %vm832 = vcmp.eq.s32.totalorder %v805, %v816
      %vm833 = vcmp.eq.s32.totalorder %v805, %v817
      %vm834 = vcmp.eq.s32.totalorder %v805, %v818
      %vm835 = vcmp.eq.s32.totalorder %v805, %v819
      %vm836 = vcmp.eq.s32.totalorder %v805, %v820
      %vm837 = vcmp.eq.s32.totalorder %v805, %v821
      %v838 = vsel %vm822, 1, 0
      %v839 = vsel %vm823, 1, 0
      %v840 = vsel %vm824, 1, 0
      %v841 = vsel %vm825, 1, 0
      %v842 = vsel %vm826, 1, 0
      %v843 = vsel %vm827, 1, 0
      %v844 = vsel %vm828, 1, 0
      %v845 = vsel %vm829, 1, 0
      %v846 = vsel %vm830, 1, 0
      %v847 = vsel %vm831, 1, 0
      %v848 = vsel %vm832, 1, 0
      %v849 = vsel %vm833, 1, 0
      %v850 = vsel %vm834, 1, 0
      %v851 = vsel %vm835, 1, 0
      %v852 = vsel %vm836, 1, 0
      %v853 = vsel %vm837, 1, 0
      %v854 = vcvt.s32.f32 %v838
      %v855 = vcvt.s32.f32 %v839
      %v856 = vcvt.s32.f32 %v840
      %v857 = vcvt.s32.f32 %v841
      %v858 = vcvt.s32.f32 %v842
      %v859 = vcvt.s32.f32 %v843
      %v860 = vcvt.s32.f32 %v844
      %v861 = vcvt.s32.f32 %v845
      %v862 = vcvt.s32.f32 %v846
      %v863 = vcvt.s32.f32 %v847
      %v864 = vcvt.s32.f32 %v848
      %v865 = vcvt.s32.f32 %v849
      %v866 = vcvt.s32.f32 %v850
      %v867 = vcvt.s32.f32 %v851
      %v868 = vcvt.s32.f32 %v852
      %v869 = vcvt.s32.f32 %v853
      %v872 = vperm.slane %v322, 0
      %v873 = vperm.slane %v322, 1
      %v874 = vperm.slane %v322, 2
      %v875 = vperm.slane %v322, 3
      %v876 = vperm.slane %v322, 4
      %v877 = vperm.slane %v322, 5
      %v878 = vperm.slane %v322, 6
      %v879 = vperm.slane %v322, 7
      %v880 = vperm.slane %v323, 0
      %v881 = vperm.slane %v323, 1
      %v882 = vperm.slane %v323, 2
      %v883 = vperm.slane %v323, 3
      %v884 = vperm.slane %v323, 4
      %v885 = vperm.slane %v323, 5
      %v886 = vperm.slane %v323, 6
      %v887 = vperm.slane %v323, 7
      %v904 = vmul.f32 %v854, %v872
      %v905 = vmul.f32 %v855, %v873
      %v906 = vmul.f32 %v856, %v874
      %v907 = vmul.f32 %v857, %v875
      %v908 = vmul.f32 %v858, %v876
      %v909 = vmul.f32 %v859, %v877
      %v910 = vmul.f32 %v860, %v878
      %v911 = vmul.f32 %v861, %v879
      %v912 = vmul.f32 %v862, %v880
      %v913 = vmul.f32 %v863, %v881
      %v914 = vmul.f32 %v864, %v882
      %v915 = vmul.f32 %v865, %v883
      %v916 = vmul.f32 %v866, %v884
      %v917 = vmul.f32 %v867, %v885
      %v918 = vmul.f32 %v868, %v886
      %v919 = vmul.f32 %v869, %v887
      %v920 = vsub.f32 %v904, %v578
      %v921 = vsub.f32 %v905, %v593
      %v922 = vsub.f32 %v906, %v608
      %v923 = vsub.f32 %v907, %v623
      %v924 = vsub.f32 %v908, %v638
      %v925 = vsub.f32 %v909, %v653
      %v926 = vsub.f32 %v910, %v668
      %v927 = vsub.f32 %v911, %v683
      %v928 = vsub.f32 %v912, %v698
      %v929 = vsub.f32 %v913, %v713
      %v930 = vsub.f32 %v914, %v728
      %v931 = vsub.f32 %v915, %v743
      %v932 = vsub.f32 %v916, %v758
      %v933 = vsub.f32 %v917, %v773
      %v934 = vsub.f32 %v918, %v788
      %v935 = vsub.f32 %v919, %v803
      %v936 = vand.u32 2147483647, %v920
      %v937 = vand.u32 2147483647, %v921
      %v938 = vand.u32 2147483647, %v922
      %v939 = vand.u32 2147483647, %v923
      %v940 = vand.u32 2147483647, %v924
      %v941 = vand.u32 2147483647, %v925
      %v942 = vand.u32 2147483647, %v926
      %v943 = vand.u32 2147483647, %v927
      %v944 = vand.u32 2147483647, %v928
      %v945 = vand.u32 2147483647, %v929
      %v946 = vand.u32 2147483647, %v930
      %v947 = vand.u32 2147483647, %v931
      %v948 = vand.u32 2147483647, %v932
      %v949 = vand.u32 2147483647, %v933
      %v950 = vand.u32 2147483647, %v934
      %v951 = vand.u32 2147483647, %v935
      %v952 = vmul.f32 %v936, %v872
      %v953 = vmul.f32 %v937, %v873
      %v954 = vmul.f32 %v938, %v874
      %v955 = vmul.f32 %v939, %v875
      %v956 = vmul.f32 %v940, %v876
      %v957 = vmul.f32 %v941, %v877
      %v958 = vmul.f32 %v942, %v878
      %v959 = vmul.f32 %v943, %v879
      %v960 = vmul.f32 %v944, %v880
      %v961 = vmul.f32 %v945, %v881
      %v962 = vmul.f32 %v946, %v882
      %v963 = vmul.f32 %v947, %v883
      %v964 = vmul.f32 %v948, %v884
      %v965 = vmul.f32 %v949, %v885
      %v966 = vmul.f32 %v950, %v886
      %v967 = vmul.f32 %v951, %v887
      %v968 = vmul.f32 %v854, %v420
      %v969 = vmul.f32 %v855, %v421
      %v970 = vmul.f32 %v856, %v422
      %v971 = vmul.f32 %v857, %v423
      %v972 = vmul.f32 %v858, %v424
      %v973 = vmul.f32 %v859, %v425
      %v974 = vmul.f32 %v860, %v426
      %v975 = vmul.f32 %v861, %v427
      %v976 = vmul.f32 %v862, %v428
      %v977 = vmul.f32 %v863, %v429
      %v978 = vmul.f32 %v864, %v430
      %v979 = vmul.f32 %v865, %v431
      %v980 = vmul.f32 %v866, %v432
      %v981 = vmul.f32 %v867, %v433
      %v982 = vmul.f32 %v868, %v434
      %v983 = vmul.f32 %v869, %v435
      %v984 = vrot.slane %v968, 4
      %v985 = vadd.f32 %v968, %v984
      %v986 = vrot.slane %v985, 2
      %v987 = vadd.f32 %v985, %v986
      %v988 = vrot.slane %v987, 1
      %v989 = vadd.f32 %v987, %v988
      %v990 = vrot.slane %v969, 4
      %v991 = vadd.f32 %v969, %v990
      %v992 = vrot.slane %v991, 2
      %v993 = vadd.f32 %v991, %v992
      %v994 = vrot.slane %v993, 1
      %v995 = vadd.f32 %v993, %v994
      %v996 = vrot.slane %v970, 4
      %v997 = vadd.f32 %v970, %v996
      %v998 = vrot.slane %v997, 2
      %v999 = vadd.f32 %v997, %v998
      %v1000 = vrot.slane %v999, 1
      %v1001 = vadd.f32 %v999, %v1000
      %v1002 = vrot.slane %v971, 4
      %v1003 = vadd.f32 %v971, %v1002
      %v1004 = vrot.slane %v1003, 2
      %v1005 = vadd.f32 %v1003, %v1004
      %v1006 = vrot.slane %v1005, 1
      %v1007 = vadd.f32 %v1005, %v1006
      %v1008 = vrot.slane %v972, 4
      %v1009 = vadd.f32 %v972, %v1008
      %v1010 = vrot.slane %v1009, 2
      %v1011 = vadd.f32 %v1009, %v1010
      %v1012 = vrot.slane %v1011, 1
      %v1013 = vadd.f32 %v1011, %v1012
      %v1014 = vrot.slane %v973, 4
      %v1015 = vadd.f32 %v973, %v1014
      %v1016 = vrot.slane %v1015, 2
      %v1017 = vadd.f32 %v1015, %v1016
      %v1018 = vrot.slane %v1017, 1
      %v1019 = vadd.f32 %v1017, %v1018
      %v1020 = vrot.slane %v974, 4
      %v1021 = vadd.f32 %v974, %v1020
      %v1022 = vrot.slane %v1021, 2
      %v1023 = vadd.f32 %v1021, %v1022
      %v1024 = vrot.slane %v1023, 1
      %v1025 = vadd.f32 %v1023, %v1024
      %v1026 = vrot.slane %v975, 4
      %v1027 = vadd.f32 %v975, %v1026
      %v1028 = vrot.slane %v1027, 2
      %v1029 = vadd.f32 %v1027, %v1028
      %v1030 = vrot.slane %v1029, 1
      %v1031 = vadd.f32 %v1029, %v1030
      %v1032 = vrot.slane %v976, 4
      %v1033 = vadd.f32 %v976, %v1032
      %v1034 = vrot.slane %v1033, 2
      %v1035 = vadd.f32 %v1033, %v1034
      %v1036 = vrot.slane %v1035, 1
      %v1037 = vadd.f32 %v1035, %v1036
      %v1038 = vrot.slane %v977, 4
      %v1039 = vadd.f32 %v977, %v1038
      %v1040 = vrot.slane %v1039, 2
      %v1041 = vadd.f32 %v1039, %v1040
      %v1042 = vrot.slane %v1041, 1
      %v1043 = vadd.f32 %v1041, %v1042
      %v1044 = vrot.slane %v978, 4
      %v1045 = vadd.f32 %v978, %v1044
      %v1046 = vrot.slane %v1045, 2
      %v1047 = vadd.f32 %v1045, %v1046
      %v1048 = vrot.slane %v1047, 1
      %v1049 = vadd.f32 %v1047, %v1048
      %v1050 = vrot.slane %v979, 4
      %v1051 = vadd.f32 %v979, %v1050
      %v1052 = vrot.slane %v1051, 2
      %v1053 = vadd.f32 %v1051, %v1052
      %v1054 = vrot.slane %v1053, 1
      %v1055 = vadd.f32 %v1053, %v1054
      %v1056 = vrot.slane %v980, 4
      %v1057 = vadd.f32 %v980, %v1056
      %v1058 = vrot.slane %v1057, 2
      %v1059 = vadd.f32 %v1057, %v1058
      %v1060 = vrot.slane %v1059, 1
      %v1061 = vadd.f32 %v1059, %v1060
      %v1062 = vrot.slane %v981, 4
      %v1063 = vadd.f32 %v981, %v1062
      %v1064 = vrot.slane %v1063, 2
      %v1065 = vadd.f32 %v1063, %v1064
      %v1066 = vrot.slane %v1065, 1
      %v1067 = vadd.f32 %v1065, %v1066
      %v1068 = vrot.slane %v982, 4
      %v1069 = vadd.f32 %v982, %v1068
      %v1070 = vrot.slane %v1069, 2
      %v1071 = vadd.f32 %v1069, %v1070
      %v1072 = vrot.slane %v1071, 1
      %v1073 = vadd.f32 %v1071, %v1072
      %v1074 = vrot.slane %v983, 4
      %v1075 = vadd.f32 %v983, %v1074
      %v1076 = vrot.slane %v1075, 2
      %v1077 = vadd.f32 %v1075, %v1076
      %v1078 = vrot.slane %v1077, 1
      %v1079 = vadd.f32 %v1077, %v1078
      %v1080 = vlog2.pop %v473
      %v1081 = vmul.f32 %v1080, 0.6931472
      %v1082 = vlog2.pop %v479
      %v1083 = vmul.f32 %v1082, 0.6931472
      %v1084 = vlog2.pop %v485
      %v1085 = vmul.f32 %v1084, 0.6931472
      %v1086 = vlog2.pop %v491
      %v1087 = vmul.f32 %v1086, 0.6931472
      %v1088 = vlog2.pop %v497
      %v1089 = vmul.f32 %v1088, 0.6931472
      %v1090 = vlog2.pop %v503
      %v1091 = vmul.f32 %v1090, 0.6931472
      %v1092 = vlog2.pop %v509
      %v1093 = vmul.f32 %v1092, 0.6931472
      %v1094 = vlog2.pop %v515
      %v1095 = vmul.f32 %v1094, 0.6931472
      %v1096 = vlog2.pop %v521
      %v1097 = vmul.f32 %v1096, 0.6931472
      %v1098 = vlog2.pop %v527
      %v1099 = vmul.f32 %v1098, 0.6931472
      %v1100 = vlog2.pop %v533
      %v1101 = vmul.f32 %v1100, 0.6931472
      %v1102 = vlog2.pop %v539
      %v1103 = vmul.f32 %v1102, 0.6931472
      %v1104 = vlog2.pop %v545
      %v1105 = vmul.f32 %v1104, 0.6931472
      %v1106 = vlog2.pop %v551
      %v1107 = vmul.f32 %v1106, 0.6931472
      %v1108 = vlog2.pop %v557
      %v1109 = vmul.f32 %v1108, 0.6931472
      %v1110 = vlog2.pop %v563
      %v1111 = vmul.f32 %v1110, 0.6931472
      %v1112 = vsub.f32 %v1081, %v989
      %v1113 = vsub.f32 %v1083, %v995
      %v1114 = vsub.f32 %v1085, %v1001
      %v1115 = vsub.f32 %v1087, %v1007
      %v1116 = vsub.f32 %v1089, %v1013
      %v1117 = vsub.f32 %v1091, %v1019
      %v1118 = vsub.f32 %v1093, %v1025
      %v1119 = vsub.f32 %v1095, %v1031
      %v1120 = vsub.f32 %v1097, %v1037
      %v1121 = vsub.f32 %v1099, %v1043
      %v1122 = vsub.f32 %v1101, %v1049
      %v1123 = vsub.f32 %v1103, %v1055
      %v1124 = vsub.f32 %v1105, %v1061
      %v1125 = vsub.f32 %v1107, %v1067
      %v1126 = vsub.f32 %v1109, %v1073
      %v1127 = vsub.f32 %v1111, %v1079
      %v1128 = vmul.f32 %v1112, %v872
      %v1129 = vmul.f32 %v1113, %v873
      %v1130 = vmul.f32 %v1114, %v874
      %v1131 = vmul.f32 %v1115, %v875
      %v1132 = vmul.f32 %v1116, %v876
      %v1133 = vmul.f32 %v1117, %v877
      %v1134 = vmul.f32 %v1118, %v878
      %v1135 = vmul.f32 %v1119, %v879
      %v1136 = vmul.f32 %v1120, %v880
      %v1137 = vmul.f32 %v1121, %v881
      %v1138 = vmul.f32 %v1122, %v882
      %v1139 = vmul.f32 %v1123, %v883
      %v1140 = vmul.f32 %v1124, %v884
      %v1141 = vmul.f32 %v1125, %v885
      %v1142 = vmul.f32 %v1126, %v886
      %v1143 = vmul.f32 %v1127, %v887
      %v1144 = vsub.f32 0.0, %v952
      %v1145 = vsub.f32 0.0, %v953
      %v1146 = vsub.f32 0.0, %v954
      %v1147 = vsub.f32 0.0, %v955
      %v1148 = vsub.f32 0.0, %v956
      %v1149 = vsub.f32 0.0, %v957
      %v1150 = vsub.f32 0.0, %v958
      %v1151 = vsub.f32 0.0, %v959
      %v1152 = vsub.f32 0.0, %v960
      %v1153 = vsub.f32 0.0, %v961
      %v1154 = vsub.f32 0.0, %v962
      %v1155 = vsub.f32 0.0, %v963
      %v1156 = vsub.f32 0.0, %v964
      %v1157 = vsub.f32 0.0, %v965
      %v1158 = vsub.f32 0.0, %v966
      %v1159 = vsub.f32 0.0, %v967
      %1160 = vst [vmem:[%s282] sm:$0xff] %v1144
      %1161 = vst [vmem:[%s282 + $0x8] sm:$0xff] %v1145
      %1162 = vst [vmem:[%s282 + $0x10] sm:$0xff] %v1146
      %1163 = vst [vmem:[%s282 + $0x18] sm:$0xff] %v1147
      %1164 = vst [vmem:[%s282 + $0x20] sm:$0xff] %v1148
      %1165 = vst [vmem:[%s282 + $0x28] sm:$0xff] %v1149
      %1166 = vst [vmem:[%s282 + $0x30] sm:$0xff] %v1150
      %1167 = vst [vmem:[%s282 + $0x38] sm:$0xff] %v1151
      %1168 = vst [vmem:[%s282 + $0x40] sm:$0xff] %v1152
      %1169 = vst [vmem:[%s282 + $0x48] sm:$0xff] %v1153
      %1170 = vst [vmem:[%s282 + $0x50] sm:$0xff] %v1154
      %1171 = vst [vmem:[%s282 + $0x58] sm:$0xff] %v1155
      %1172 = vst [vmem:[%s282 + $0x60] sm:$0xff] %v1156
      %1173 = vst [vmem:[%s282 + $0x68] sm:$0xff] %v1157
      %1174 = vst [vmem:[%s282 + $0x70] sm:$0xff] %v1158
      %1175 = vst [vmem:[%s282 + $0x78] sm:$0xff] %v1159
      %1176 = vst [vmem:[%s290] sm:$0xff] %v904
      %1177 = vst [vmem:[%s290 + $0x8] sm:$0xff] %v905
      %1178 = vst [vmem:[%s290 + $0x10] sm:$0xff] %v906
      %1179 = vst [vmem:[%s290 + $0x18] sm:$0xff] %v907
      %1180 = vst [vmem:[%s290 + $0x20] sm:$0xff] %v908
      %1181 = vst [vmem:[%s290 + $0x28] sm:$0xff] %v909
      %1182 = vst [vmem:[%s290 + $0x30] sm:$0xff] %v910
      %1183 = vst [vmem:[%s290 + $0x38] sm:$0xff] %v911
      %1184 = vst [vmem:[%s290 + $0x40] sm:$0xff] %v912
      %1185 = vst [vmem:[%s290 + $0x48] sm:$0xff] %v913
      %1186 = vst [vmem:[%s290 + $0x50] sm:$0xff] %v914
      %1187 = vst [vmem:[%s290 + $0x58] sm:$0xff] %v915
      %1188 = vst [vmem:[%s290 + $0x60] sm:$0xff] %v916
      %1189 = vst [vmem:[%s290 + $0x68] sm:$0xff] %v917
      %1190 = vst [vmem:[%s290 + $0x70] sm:$0xff] %v918
      %1191 = vst [vmem:[%s290 + $0x78] sm:$0xff] %v919
      %v1208 = vrot.slane %v1129, 7
      %v1209 = vrot.slane %v1130, 6
      %v1210 = vrot.slane %v1131, 5
      %v1211 = vrot.slane %v1132, 4
      %v1212 = vrot.slane %v1133, 3
      %v1213 = vrot.slane %v1134, 2
      %v1214 = vrot.slane %v1135, 1
      %v1215 = vrot.slane %v1137, 7
      %v1216 = vrot.slane %v1138, 6
      %v1217 = vrot.slane %v1139, 5
      %v1218 = vrot.slane %v1140, 4
      %v1219 = vrot.slane %v1141, 3
      %v1220 = vrot.slane %v1142, 2
      %v1221 = vrot.slane %v1143, 1
      %vm1222 = vcmask 1040384
      %v1223 = vsel %vm1222, %v1128, %v1208
      %vm1224 = vcmask 1042434
      %v1225 = vsel %vm1224, %v1209, %v1210
      %vm1226 = vcmask 1041408
      %v1227 = vsel %vm1226, %v1223, %v1225
      %vm1228 = vcmask 1044484
      %v1229 = vsel %vm1228, %v1211, %v1212
      %vm1230 = vcmask 1046534
      %v1231 = vsel %vm1230, %v1213, %v1214
      %vm1232 = vcmask 1045508
      %v1233 = vsel %vm1232, %v1229, %v1231
      %vm1234 = vcmask 1043456
      %v1235 = vsel %vm1234, %v1227, %v1233
      %v1236 = vsel %vm1222, %v1136, %v1215
      %v1237 = vsel %vm1224, %v1216, %v1217
      %v1238 = vsel %vm1226, %v1236, %v1237
      %v1239 = vsel %vm1228, %v1218, %v1219
      %v1240 = vsel %vm1230, %v1220, %v1221
      %v1241 = vsel %vm1232, %v1239, %v1240
      %v1242 = vsel %vm1234, %v1238, %v1241
      %1245 = vst [vmem:[%s297] sm:$0xff] %v1235
      %1246 = vst [vmem:[%s297 + $0x8] sm:$0xff] %v1242
      %s1247 = sadd.s32 %s20, %s21
      %s1248 = smul.u32 16, %s1247
      %p1249 = scmp.lt.s32.totalorder %s1248, 31
      %s1250 = scalar_select %p1249, %s1248, 31
      %s1251 = smul.addr %s1250, 8
      %s1252 = scalar_lea.vmem %s2, %s1251
      %s1253 = sadd.s32 %s20, %s21
      %s1254 = smul.u32 16, %s1253
      %p1255 = scmp.lt.s32.totalorder %s1254, 31
      %s1256 = scalar_select %p1255, %s1254, 31
      %s1257 = smul.addr %s1256, 8
      %s1258 = scalar_lea.vmem %s3, %s1257
      %s1259 = sadd.s32 %s20, %s21
      %s1260 = smul.u32 16, %s1259
      %p1261 = scmp.lt.s32.totalorder %s1260, 31
      %s1262 = scalar_select %p1261, %s1260, 31
      %s1263 = scalar_lea.vmem %s4, %s1262
      // Predicated region
      $region29: #{panoptic_loss_forward.2} parent=27 // pred_check
        %p1264 = pneg %p104
      $region30: #{panoptic_loss_forward.2} parent=27 // pred_check_branch
        %1266 = sbr.rel (%p1264) target = $region32
      $region31: #{panoptic_loss_forward.2} parent=27 // pred_region
        %s1267 = sadd.s32 %s20, %s21
        %s1268 = smul.u32 16, %s1267
      $region32: #{panoptic_loss_forward.2} parent=27 // pred_fallthru
        _
      // Predicated region
      $region33: #{panoptic_loss_forward.2} parent=27 // pred_check
        %p1269 = pneg %p132
      $region34: #{panoptic_loss_forward.2} parent=27 // pred_check_branch
        %1271 = sbr.rel (%p1269) target = $region36
      $region35: #{panoptic_loss_forward.2} parent=27 // pred_region
        %s1272 = sadd.s32 %s20, %s21
        %s1273 = smul.u32 16, %s1272
      $region36: #{panoptic_loss_forward.2} parent=27 // pred_fallthru
        _
      // Predicated region
      $region37: #{panoptic_loss_forward.2} parent=27 // pred_check
        %p1274 = pneg %p160
      $region38: #{panoptic_loss_forward.2} parent=27 // pred_check_branch
        %1276 = sbr.rel (%p1274) target = $region40
      $region39: #{panoptic_loss_forward.2} parent=27 // pred_region
        %s1277 = sadd.s32 %s20, %s21
        %s1278 = smul.u32 16, %s1277
      $region40: #{panoptic_loss_forward.2} parent=27 // pred_fallthru
        _
    $region28: #{panoptic_loss_forward.2} parent=5 // pred_fallthru
      _
    %p1279 = scmp.le.s32.totalorder 2, %s11
    // Predicated region
    $region41: #{panoptic_loss_forward.2} parent=5 // pred_check
      %p1280 = pneg %p1279
    $region42: #{panoptic_loss_forward.2} parent=5 // pred_check_branch
      %1282 = sbr.rel (%p1280) target = $region44
    $region43: #{panoptic_loss_forward.2} parent=5 // pred_region
      %s1283 = ssub.s32 %s11, 2
      // Predicated region
      $region45: #{panoptic_loss_forward.2} parent=43 // pred_check
        %p1284 = pneg %p110
      $region46: #{panoptic_loss_forward.2} parent=43 // pred_check_branch
        %1286 = sbr.rel (%p1284) target = $region48
      $region47: #{panoptic_loss_forward.2} parent=43 // pred_region
        %s1287 = sadd.s32 %s22, %s23
        %s1288 = smul.u32 16, %s1287
        %p1289 = scmp.lt.s32.totalorder %s1288, 31
        %s1290 = scalar_select %p1289, %s1288, 31
        %s1291 = smul.addr %s1290, 8
        %s1292 = scalar_lea.vmem %s2, %s1291
      $region48: #{panoptic_loss_forward.2} parent=43 // pred_fallthru
        _
      // Predicated region
      $region49: #{panoptic_loss_forward.2} parent=43 // pred_check
        %p1293 = pneg %p138
      $region50: #{panoptic_loss_forward.2} parent=43 // pred_check_branch
        %1295 = sbr.rel (%p1293) target = $region52
      $region51: #{panoptic_loss_forward.2} parent=43 // pred_region
        %s1296 = sadd.s32 %s22, %s23
        %s1297 = smul.u32 16, %s1296
        %p1298 = scmp.lt.s32.totalorder %s1297, 31
        %s1299 = scalar_select %p1298, %s1297, 31
        %s1300 = smul.addr %s1299, 8
        %s1301 = scalar_lea.vmem %s3, %s1300
      $region52: #{panoptic_loss_forward.2} parent=43 // pred_fallthru
        _
      // Predicated region
      $region53: #{panoptic_loss_forward.2} parent=43 // pred_check
        %p1302 = pneg %p166
      $region54: #{panoptic_loss_forward.2} parent=43 // pred_check_branch
        %1304 = sbr.rel (%p1302) target = $region56
      $region55: #{panoptic_loss_forward.2} parent=43 // pred_region
        %s1305 = sadd.s32 %s22, %s23
        %s1306 = smul.u32 16, %s1305
        %p1307 = scmp.lt.s32.totalorder %s1306, 31
        %s1308 = scalar_select %p1307, %s1306, 31
        %s1309 = scalar_lea.vmem %s4, %s1308
      $region56: #{panoptic_loss_forward.2} parent=43 // pred_fallthru
        _
    $region44: #{panoptic_loss_forward.2} parent=5 // pred_fallthru
      _
  $region6: #{panoptic_loss_forward.2} parent=0 // loop_footer
    %s15 = sadd.s32 1, %s11
  $region7: #{panoptic_loss_forward.2} parent=0 // loop_footer_branch
    %10 = sbr.rel target = $region3
  $region8: #{panoptic_loss_forward.2} parent=0 // loop_exit
    _

// kernel: panoptic_loss_forward.3
$region0: #{panoptic_loss_forward.3}
  #allocation0 [shape = 'u32[]', space=smem, size = 0x4, offset = 0x4, fixed_abs, tag = 'smem constant byte address 0x4 - core index']
  #allocation1 [shape = 'u32[72,128]{1,0:T(1,128)}', space=vmem, size = 0x9000, scoped, tag = 'internal scratch']
  %s0 = inlined_call_operand.vmem [shape: f32[1,512], index: 0, kind: input, shape index: {}]
  %s1 = inlined_call_operand.vmem [shape: f32[1,512], index: 1, kind: input, shape index: {}]
  %s2 = inlined_call_operand.vmem [shape: f32[1,1024], index: 2, kind: input, shape index: {}]
  %s3 = inlined_call_operand.vmem [shape: f32[1,1024], index: 3, kind: input, shape index: {}]
  %s4 = inlined_call_operand.hbm [shape: f32[1,1], index: 4, kind: output, shape index: {0}]
  %s5 = inlined_call_operand.hbm [shape: f32[1,1], index: 5, kind: output, shape index: {1}]
  %s6 = inlined_call_operand.hbm [shape: f32[1,1], index: 6, kind: output, shape index: {2}]
  %s7 = inlined_call_operand.hbm [shape: f32[1,1], index: 7, kind: output, shape index: {3}]
  %8 = xla_tuple %s4, %s5, %s6, %s7
  %s9 = sld [smem:[#allocation0]]
  $region54: #{panoptic_loss_forward.3} parent=0
    _
  %s11 = ssub.s32 1, %s9
  %s12 = scalar_select 0, %s11, %s9
  $region1: #{panoptic_loss_forward.3} parent=0
    #allocation2 [shape = 'u8[512]{0}', space=vmem, size = 0x400, scoped, tag = 'output window, operand 0, single buffered']
    #allocation3 [shape = 's32[1]{0}', space=sflag, size = 0x4, scoped, tag = 'scoped memory for panoptic_loss_forward.3']
    #allocation4 [shape = 'u8[512]{0}', space=vmem, size = 0x400, scoped, tag = 'output window, operand 1, single buffered']
    #allocation5 [shape = 's32[1]{0}', space=sflag, size = 0x4, scoped, tag = 'scoped memory for panoptic_loss_forward.3']
    #allocation6 [shape = 'u8[512]{0}', space=vmem, size = 0x400, scoped, tag = 'output window, operand 2, single buffered']
    #allocation7 [shape = 'u8[512]{0}', space=vmem, size = 0x400, scoped, tag = 'output window, operand 3, single buffered']
    #allocation8 [shape = 's32[1]{0}', space=sflag, size = 0x4, scoped, tag = 'scoped memory for panoptic_loss_forward.3']
    %13 = vsyncpa [#allocation3], 0
    %14 = vsyncpa [#allocation5], 0
    %15 = vsyncpa [#allocation8], 0
    // Predicated region
    $region2: #{panoptic_loss_forward.3} parent=1 // pred_check
      _
    $region3: #{panoptic_loss_forward.3} parent=1 // pred_check_branch
      %17 = sbr.rel (0) target = $region5
    $region4: #{panoptic_loss_forward.3} parent=1 // pred_region
      _
    $region5: #{panoptic_loss_forward.3} parent=1 // pred_fallthru
      _
    // Predicated region
    $region6: #{panoptic_loss_forward.3} parent=1 // pred_check
      _
    $region7: #{panoptic_loss_forward.3} parent=1 // pred_check_branch
      %19 = sbr.rel (0) target = $region9
    $region8: #{panoptic_loss_forward.3} parent=1 // pred_region
      _
    $region9: #{panoptic_loss_forward.3} parent=1 // pred_fallthru
      _
    // Predicated region
    $region10: #{panoptic_loss_forward.3} parent=1 // pred_check
      _
    $region11: #{panoptic_loss_forward.3} parent=1 // pred_check_branch
      %21 = sbr.rel (0) target = $region13
    $region12: #{panoptic_loss_forward.3} parent=1 // pred_region
      _
    $region13: #{panoptic_loss_forward.3} parent=1 // pred_fallthru
      _
    // Predicated region
    $region14: #{panoptic_loss_forward.3} parent=1 // pred_check
      _
    $region15: #{panoptic_loss_forward.3} parent=1 // pred_check_branch
      %23 = sbr.rel (0) target = $region17
    $region16: #{panoptic_loss_forward.3} parent=1 // pred_region
      _
    $region17: #{panoptic_loss_forward.3} parent=1 // pred_fallthru
      _
    %p24 = scmp.eq.s32.totalorder 0, 0
    // Predicated region
    $region18: #{panoptic_loss_forward.3} parent=1 // pred_check
      %p25 = pneg %p24
    $region19: #{panoptic_loss_forward.3} parent=1 // pred_check_branch
      %27 = sbr.rel (%p25) target = $region21
    $region20: #{panoptic_loss_forward.3} parent=1 // pred_region
      %vm28 = vcmask 0
      %29 = vst.msk [vmem:[#allocation2] sm:$0x1] %vm28, 0.0
      %30 = vst.msk [vmem:[#allocation4] sm:$0x1] %vm28, 0.0
      %31 = vst.msk [vmem:[#allocation6] sm:$0x1] %vm28, 0.0
      %32 = vst.msk [vmem:[#allocation7] sm:$0x1] %vm28, 0.0
    $region21: #{panoptic_loss_forward.3} parent=1 // pred_fallthru
      _
    %v33 = vld [vmem:[%s0] sm:$0xf]
    %v34 = vld [vmem:[%s1] sm:$0xf]
    %v35 = vld [vmem:[%s2] sm:$0xff]
    %v36 = vld [vmem:[%s3] sm:$0xff]
    %v37 = vsub.f32 %v33, %v34
    %v38 = vld [vmem:[#allocation2] sm:$0x1]
    %v39 = vmul.f32 %v37, %v37
    %v41 = vperm.slane %v39, 0
    %v42 = vperm.slane %v39, 1
    %v43 = vperm.slane %v39, 2
    %v44 = vperm.slane %v39, 3
    %vm49 = vcmask 1040384
    %v50 = vsel %vm49, %v41, 0.0
    %v51 = vsel %vm49, %v42, 0.0
    %v52 = vadd.f32 %v50, %v51
    %v53 = vsel %vm49, %v43, 0.0
    %v54 = vadd.f32 %v52, %v53
    %v55 = vsel %vm49, %v44, 0.0
    %v56 = vadd.f32 %v54, %v55
    %57 = vadd.xlane.f32.xlu0 %v56
    %v58 = vpop.xlane.xlu0 %57
    %v59 = vrot.slane %v58, 4
    %v60 = vadd.f32 %v58, %v59
    %v61 = vrot.slane %v60, 2
    %v62 = vadd.f32 %v60, %v61
    %v63 = vrot.slane %v62, 1
    %v64 = vadd.f32 %v62, %v63
    %s65 = vtos %v64
    %v66 = vstv %s65
    %v67 = vadd.f32 %v38, %v66
    %vm68 = vcmask 0
    %69 = vst.msk [vmem:[#allocation2] sm:$0x1] %vm68, %v67
    %v70 = vld [vmem:[#allocation4] sm:$0x1]
    %vm71 = vcmp.gt.f32.partialorder %v34, 0.0
    %v72 = vsel %vm71, 1, 0
    %v73 = vcvt.s32.f32 %v72
    %v75 = vperm.slane %v73, 0
    %v76 = vperm.slane %v73, 1
    %v77 = vperm.slane %v73, 2
    %v78 = vperm.slane %v73, 3
    %v83 = vsel %vm49, %v75, 0.0
    %v84 = vsel %vm49, %v76, 0.0
    %v85 = vadd.f32 %v83, %v84
    %v86 = vsel %vm49, %v77, 0.0
    %v87 = vadd.f32 %v85, %v86
    %v88 = vsel %vm49, %v78, 0.0
    %v89 = vadd.f32 %v87, %v88
    %90 = vadd.xlane.f32.xlu0 %v89
    %v91 = vpop.xlane.xlu0 %90
    %v92 = vrot.slane %v91, 4
    %v93 = vadd.f32 %v91, %v92
    %v94 = vrot.slane %v93, 2
    %v95 = vadd.f32 %v93, %v94
    %v96 = vrot.slane %v95, 1
    %v97 = vadd.f32 %v95, %v96
    %s98 = vtos %v97
    %v99 = vstv %s98
    %v100 = vadd.f32 %v70, %v99
    %101 = vst.msk [vmem:[#allocation4] sm:$0x1] %vm68, %v100
    %v102 = vld [vmem:[#allocation6] sm:$0x1]
    %v103 = vsub.f32 %v35, %v36
    %v104 = vand.u32 2147483647, %v103
    %v106 = vperm.slane %v104, 0
    %v107 = vperm.slane %v104, 1
    %v108 = vperm.slane %v104, 2
    %v109 = vperm.slane %v104, 3
    %v110 = vperm.slane %v104, 4
    %v111 = vperm.slane %v104, 5
    %v112 = vperm.slane %v104, 6
    %v113 = vperm.slane %v104, 7
    %v122 = vsel %vm49, %v106, 0.0
    %v123 = vsel %vm49, %v107, 0.0
    %v124 = vadd.f32 %v122, %v123
    %v125 = vsel %vm49, %v108, 0.0
    %v126 = vadd.f32 %v124, %v125
    %v127 = vsel %vm49, %v109, 0.0
    %v128 = vadd.f32 %v126, %v127
    %v129 = vsel %vm49, %v110, 0.0
    %v130 = vadd.f32 %v128, %v129
    %v131 = vsel %vm49, %v111, 0.0
    %v132 = vadd.f32 %v130, %v131
    %v133 = vsel %vm49, %v112, 0.0
    %v134 = vadd.f32 %v132, %v133
    %v135 = vsel %vm49, %v113, 0.0
    %v136 = vadd.f32 %v134, %v135
    %137 = vadd.xlane.f32.xlu0 %v136
    %v138 = vpop.xlane.xlu0 %137
    %v139 = vrot.slane %v138, 4
    %v140 = vadd.f32 %v138, %v139
    %v141 = vrot.slane %v140, 2
    %v142 = vadd.f32 %v140, %v141
    %v143 = vrot.slane %v142, 1
    %v144 = vadd.f32 %v142, %v143
    %s145 = vtos %v144
    %v146 = vstv %s145
    %v147 = vadd.f32 %v102, %v146
    %148 = vst.msk [vmem:[#allocation6] sm:$0x1] %vm68, %v147
    %v149 = vld [vmem:[#allocation7] sm:$0x1]
    %vm150 = vcmp.ne.f32.partialorder %v36, 0.0
    %v151 = vsel %vm150, 1, 0
    %v152 = vcvt.s32.f32 %v151
    %v154 = vperm.slane %v152, 0
    %v155 = vperm.slane %v152, 1
    %v156 = vperm.slane %v152, 2
    %v157 = vperm.slane %v152, 3
    %v158 = vperm.slane %v152, 4
    %v159 = vperm.slane %v152, 5
    %v160 = vperm.slane %v152, 6
    %v161 = vperm.slane %v152, 7
    %v170 = vsel %vm49, %v154, 0.0
    %v171 = vsel %vm49, %v155, 0.0
    %v172 = vadd.f32 %v170, %v171
    %v173 = vsel %vm49, %v156, 0.0
    %v174 = vadd.f32 %v172, %v173
    %v175 = vsel %vm49, %v157, 0.0
    %v176 = vadd.f32 %v174, %v175
    %v177 = vsel %vm49, %v158, 0.0
    %v178 = vadd.f32 %v176, %v177
    %v179 = vsel %vm49, %v159, 0.0
    %v180 = vadd.f32 %v178, %v179
    %v181 = vsel %vm49, %v160, 0.0
    %v182 = vadd.f32 %v180, %v181
    %v183 = vsel %vm49, %v161, 0.0
    %v184 = vadd.f32 %v182, %v183
    %185 = vadd.xlane.f32.xlu0 %v184
    %v186 = vpop.xlane.xlu0 %185
    %v187 = vrot.slane %v186, 4
    %v188 = vadd.f32 %v186, %v187
    %v189 = vrot.slane %v188, 2
    %v190 = vadd.f32 %v188, %v189
    %v191 = vrot.slane %v190, 1
    %v192 = vadd.f32 %v190, %v191
    %s193 = vtos %v192
    %v194 = vstv %s193
    %v195 = vadd.f32 %v149, %v194
    %196 = vst.msk [vmem:[#allocation7] sm:$0x1] %vm68, %v195
    // Predicated region
    $region22: #{panoptic_loss_forward.3} parent=1 // pred_check
      _
    $region23: #{panoptic_loss_forward.3} parent=1 // pred_check_branch
      %198 = sbr.rel (0) target = $region25
    $region24: #{panoptic_loss_forward.3} parent=1 // pred_region
      %200 = vsyncadd [#allocation3], 0
      %s202 = sshll.u32 [#allocation2], 4
      %s203 = int_to_ptr.vmem [resolvable:$true] %s202
      %s204 = sshll.u32 %s4, 4
      %s205 = int_to_ptr.hbm [resolvable:$true] %s204
      %207 = dma.vmem_to_hbm [thread:$0]  %s203, 16, %s205, [#allocation3]
    $region25: #{panoptic_loss_forward.3} parent=1 // pred_fallthru
      _
    // Predicated region
    $region26: #{panoptic_loss_forward.3} parent=1 // pred_check
      _
    $region27: #{panoptic_loss_forward.3} parent=1 // pred_check_branch
      %209 = sbr.rel (0) target = $region29
    $region28: #{panoptic_loss_forward.3} parent=1 // pred_region
      %211 = vsyncadd [#allocation5], 0
      %s213 = sshll.u32 [#allocation4], 4
      %s214 = int_to_ptr.vmem [resolvable:$true] %s213
      %s215 = sshll.u32 %s5, 4
      %s216 = int_to_ptr.hbm [resolvable:$true] %s215
      %218 = dma.vmem_to_hbm [thread:$0]  %s214, 16, %s216, [#allocation5]
    $region29: #{panoptic_loss_forward.3} parent=1 // pred_fallthru
      _
    // Predicated region
    $region30: #{panoptic_loss_forward.3} parent=1 // pred_check
      _
    $region31: #{panoptic_loss_forward.3} parent=1 // pred_check_branch
      %220 = sbr.rel (0) target = $region33
    $region32: #{panoptic_loss_forward.3} parent=1 // pred_region
      %222 = vsyncadd [#allocation5], 0
      %s224 = sshll.u32 [#allocation6], 4
      %s225 = int_to_ptr.vmem [resolvable:$true] %s224
      %s226 = sshll.u32 %s6, 4
      %s227 = int_to_ptr.hbm [resolvable:$true] %s226
      %229 = dma.vmem_to_hbm [thread:$0]  %s225, 16, %s227, [#allocation5]
    $region33: #{panoptic_loss_forward.3} parent=1 // pred_fallthru
      _
    // Predicated region
    $region34: #{panoptic_loss_forward.3} parent=1 // pred_check
      _
    $region35: #{panoptic_loss_forward.3} parent=1 // pred_check_branch
      %231 = sbr.rel (0) target = $region37
    $region36: #{panoptic_loss_forward.3} parent=1 // pred_region
      %233 = vsyncadd [#allocation8], 0
      %s235 = sshll.u32 [#allocation7], 4
      %s236 = int_to_ptr.vmem [resolvable:$true] %s235
      %s237 = sshll.u32 %s7, 4
      %s238 = int_to_ptr.hbm [resolvable:$true] %s237
      %240 = dma.vmem_to_hbm [thread:$0]  %s236, 16, %s238, [#allocation8]
    $region37: #{panoptic_loss_forward.3} parent=1 // pred_fallthru
      _
    // Predicated region
    $region38: #{panoptic_loss_forward.3} parent=1 // pred_check
      _
    $region39: #{panoptic_loss_forward.3} parent=1 // pred_check_branch
      %242 = sbr.rel (0) target = $region41
    $region40: #{panoptic_loss_forward.3} parent=1 // pred_region
      %244 = dma.done [#allocation3], 16
    $region41: #{panoptic_loss_forward.3} parent=1 // pred_fallthru
      _
    // Predicated region
    $region42: #{panoptic_loss_forward.3} parent=1 // pred_check
      _
    $region43: #{panoptic_loss_forward.3} parent=1 // pred_check_branch
      %246 = sbr.rel (0) target = $region45
    $region44: #{panoptic_loss_forward.3} parent=1 // pred_region
      %248 = dma.done [#allocation5], 16
    $region45: #{panoptic_loss_forward.3} parent=1 // pred_fallthru
      _
    // Predicated region
    $region46: #{panoptic_loss_forward.3} parent=1 // pred_check
      _
    $region47: #{panoptic_loss_forward.3} parent=1 // pred_check_branch
      %250 = sbr.rel (0) target = $region49
    $region48: #{panoptic_loss_forward.3} parent=1 // pred_region
      %252 = dma.done [#allocation5], 16
    $region49: #{panoptic_loss_forward.3} parent=1 // pred_fallthru
      _
    // Predicated region
    $region50: #{panoptic_loss_forward.3} parent=1 // pred_check
      _
    $region51: #{panoptic_loss_forward.3} parent=1 // pred_check_branch
      %254 = sbr.rel (0) target = $region53
    $region52: #{panoptic_loss_forward.3} parent=1 // pred_region
      %256 = dma.done [#allocation8], 16
    $region53: #{panoptic_loss_forward.3} parent=1 // pred_fallthru
      _
    %257 = vsyncpa [#allocation3], 1
    %258 = vsyncpa [#allocation5], 1
    %259 = vsyncpa [#allocation8], 1

</llo_original>
